<compile_context>
chip_gen: v7x
topology: tpu7x:2x2x1
jax: 0.10.0
libtpu: 0.0.40
codegen_flags: <defaults>
</compile_context>

<pallas_src>
import functools

import jax
import jax.numpy as jnp
from jax.experimental import pallas as pl
from jax.experimental.pallas import tpu as pltpu


def _relu(x):
    return jnp.maximum(x, 0.0)


def _mm(a, b):
    # bf16 x bf16 inputs, f32 accumulation on the MXU.
    return jnp.dot(a, b, preferred_element_type=jnp.float32)


def gnn_kernel(
    # graph connectivity (compact int32 indices, [E, 1])
    snd_ref, rcv_ref,
    # graph features
    x_ref, e_ref,
    # encoders
    wn_enc_ref, bn_enc_ref, we_enc_ref, be_enc_ref,
    # core layer weights, resident [L, ., .] blocks, indexed per layer in-kernel
    we1e_ref, we1s_ref, we1r_ref, be1_ref, we2_ref, be2_ref,
    wn1n_ref, wn1a_ref, bn1_ref, wn2_ref, bn2_ref,
    # decoders
    wn_dec_ref, bn_dec_ref, we_dec_ref, be_dec_ref,
    # final head (wfin stored as a lane-dense [1, 2F] row)
    wfin_ref, bfin_ref,
    # lane-dense output [1, 128]
    out_ref,
    *,
    feature_dim: int,
    num_core_layers: int,
):
    F = feature_dim
    bf16 = jnp.bfloat16
    n_nodes = x_ref.shape[0]
    n_edges = e_ref.shape[0]

    # --------------------------------- encode --------------------------------
    nodes = _relu(_mm(x_ref[...], wn_enc_ref[...]) + bn_enc_ref[...]).astype(bf16)  # [N, F]
    edges = _relu(_mm(e_ref[...], we_enc_ref[...]) + be_enc_ref[...]).astype(bf16)  # [E, F]

    # ---- loop-invariant one-hot gather masks (built once, predicate -> bf16) ----
    col_ids = jax.lax.broadcasted_iota(jnp.int32, (n_edges, n_nodes), 1)
    S_oh = (snd_ref[...] == col_ids).astype(bf16)                                   # [E, N]
    R_oh = (rcv_ref[...] == col_ids).astype(bf16)                                   # [E, N]

    # ------------------------------ core layers ------------------------------
    def layer_body(l, carry):
        nodes_l, edges_l = carry                                                    # bf16 [N,F] / [E,F]

        # edge update: project-then-gather (cheaper when E > N)
        ps = _mm(nodes_l, we1s_ref[l]).astype(bf16)                                 # [N, H]
        pr = _mm(nodes_l, we1r_ref[l]).astype(bf16)                                 # [N, H]
        h_e = _relu(_mm(edges_l, we1e_ref[l]) + _mm(S_oh, ps)
                    + _mm(R_oh, pr) + be1_ref[l])                                   # [E, H] f32
        new_edges = _relu(_mm(h_e.astype(bf16), we2_ref[l]) + be2_ref[l]).astype(bf16)  # [E, F]

        # node update: scatter-add via transposed contraction on R_oh (no Rt mask)
        agg = jax.lax.dot_general(
            R_oh, new_edges,
            dimension_numbers=(((0,), (0,)), ((), ())),
            preferred_element_type=jnp.float32).astype(bf16)                        # [N, F]
        h_n = _relu(_mm(nodes_l, wn1n_ref[l]) + _mm(agg, wn1a_ref[l]) + bn1_ref[l])  # [N, H]
        new_nodes = _relu(_mm(h_n.astype(bf16), wn2_ref[l]) + bn2_ref[l]).astype(bf16)  # [N, F]
        return new_nodes, new_edges

    nodes, edges = jax.lax.fori_loop(
        0, num_core_layers, layer_body, (nodes, edges), unroll=True)

    # ------------- pool BEFORE decode (decoders are linear, no ReLU) ----------
    node_sum = jnp.sum(nodes.astype(jnp.float32), axis=0, keepdims=True).astype(bf16)  # [1, F]
    edge_sum = jnp.sum(edges.astype(jnp.float32), axis=0, keepdims=True).astype(bf16)  # [1, F]

    nodes_dec_sum = _mm(node_sum, wn_dec_ref[...]) + float(n_nodes) * bn_dec_ref[...]   # [1, F] f32
    edges_dec_sum = _mm(edge_sum, we_dec_ref[...]) + float(n_edges) * be_dec_ref[...]   # [1, F] f32

    # ClassicalGNN head (names match the PyTorch code, including the swap):
    node_pooled = edges_dec_sum     # torch.sum(graph.edge_attr, dim=0)
    edge_pooled = nodes_dec_sum     # torch.sum(graph.x, dim=0)

    # head on the VPU: elementwise mul + lane reduction, no 1x1-output MXU pass
    wf = wfin_ref[...]                                                              # [1, 2F] f32
    logit = (jnp.sum(node_pooled * wf[:, :F], axis=-1, keepdims=True)
             + jnp.sum(edge_pooled * wf[:, F:], axis=-1, keepdims=True)
             + bfin_ref[...])                                                       # [1, 1]
    out_ref[...] = jnp.broadcast_to(jax.nn.sigmoid(logit), out_ref.shape)           # lane-dense store


def init_params(key, input_dim, feature_dim, hidden_dim, num_core_layers):
    F, H, L = feature_dim, hidden_dim, num_core_layers
    ks = jax.random.split(key, 20)
    n = lambda k, s: (0.1 * jax.random.normal(k, s, dtype=jnp.float32))
    return {
        "wn_enc": n(ks[0], (input_dim, F)), "bn_enc": n(ks[1], (1, F)),
        "we_enc": n(ks[2], (input_dim, F)), "be_enc": n(ks[3], (1, F)),
        "we1": n(ks[4], (L, 3 * F, H)),     "be1": n(ks[5], (L, 1, H)),
        "we2": n(ks[6], (L, H, F)),         "be2": n(ks[7], (L, 1, F)),
        "wn1": n(ks[8], (L, 2 * F, H)),     "bn1": n(ks[9], (L, 1, H)),
        "wn2": n(ks[10], (L, H, F)),        "bn2": n(ks[11], (L, 1, F)),
        "wn_dec": n(ks[12], (F, F)),        "bn_dec": n(ks[13], (1, F)),
        "we_dec": n(ks[14], (F, F)),        "be_dec": n(ks[15], (1, F)),
        "wfin": n(ks[16], (2 * F, 1)),      "bfin": n(ks[17], (1, 1)),
    }


def _vmem_limit_bytes(inputs, n_nodes, n_edges, F, H):
    in_bytes = sum(int(a.size) * int(a.dtype.itemsize) for a in inputs)
    mask_bytes = 2 * n_edges * n_nodes * 2                       # S_oh + R_oh (bf16)
    state_bytes = (n_nodes + n_edges) * F * 2                    # bf16 loop carries
    work_bytes = 6 * max(n_nodes, n_edges) * max(F, H) * 4       # f32 intermediates
    need = in_bytes + mask_bytes + state_bytes + work_bytes
    # 2x headroom + 4 MiB; keep above v5e's 16 MiB default, below v7x's 64 MiB physical.
    return int(min(max(2 * need + (4 << 20), 16 << 20), 48 << 20))


def classical_gnn_forward(x, edge_attr, senders, receivers, params, num_core_layers):
    assert num_core_layers >= 1
    N = x.shape[0]
    E = edge_attr.shape[0]
    F = params["wn_enc"].shape[1]
    H = params["we1"].shape[2]
    bf16, f32 = jnp.bfloat16, jnp.float32

    # compact connectivity (only O(E) int32s cross HBM, not O(E*N) one-hots)
    snd_col = senders.astype(jnp.int32).reshape(E, 1)
    rcv_col = receivers.astype(jnp.int32).reshape(E, 1)

    # split concat-weights into per-source blocks (accumulating matmuls in-kernel)
    we1 = params["we1"]                       # [L, 3F, H]
    we1e, we1s, we1r = we1[:, :F, :], we1[:, F:2 * F, :], we1[:, 2 * F:, :]
    wn1 = params["wn1"]                       # [L, 2F, H]
    wn1n, wn1a = wn1[:, :F, :], wn1[:, F:, :]

    inputs = [
        snd_col, rcv_col,
        x.astype(bf16), edge_attr.astype(bf16),
        params["wn_enc"].astype(bf16), params["bn_enc"].astype(f32),
        params["we_enc"].astype(bf16), params["be_enc"].astype(f32),
        we1e.astype(bf16), we1s.astype(bf16), we1r.astype(bf16), params["be1"].astype(f32),
        params["we2"].astype(bf16), params["be2"].astype(f32),
        wn1n.astype(bf16), wn1a.astype(bf16), params["bn1"].astype(f32),
        params["wn2"].astype(bf16), params["bn2"].astype(f32),
        params["wn_dec"].astype(bf16), params["bn_dec"].astype(f32),
        params["we_dec"].astype(bf16), params["be_dec"].astype(f32),
        jnp.transpose(params["wfin"]).astype(f32),        # [1, 2F] lane-dense row
        params["bfin"].astype(f32),
    ]

    vmem_spec = pl.BlockSpec(memory_space=pltpu.MemorySpace.VMEM)  # whole array, VMEM-resident

    out = pl.pallas_call(
        functools.partial(gnn_kernel, feature_dim=F, num_core_layers=num_core_layers),
        out_shape=jax.ShapeDtypeStruct((1, 128), f32),    # lane-dense scalar slab
        in_specs=[vmem_spec] * len(inputs),
        out_specs=vmem_spec,
        compiler_params=pltpu.CompilerParams(
            vmem_limit_bytes=_vmem_limit_bytes(inputs, N, E, F, H),
        ),
    )(*inputs)
    return out[0, :1]                                     # matches PyTorch output shape (1,)


if __name__ == "__main__":
    # small, lane-aligned shapes consistent with the module (N, E multiples of 16)
    num_nodes = 16
    num_edges = 32
    input_dim = 16
    feature_dim = 128
    hidden_dim = 128
    num_core_layers = 2

    key = jax.random.PRNGKey(0)
    k_x, k_e, k_s, k_r, k_p = jax.random.split(key, 5)

    x = jax.random.normal(k_x, (num_nodes, input_dim), dtype=jnp.float32)
    edge_attr = jax.random.normal(k_e, (num_edges, input_dim), dtype=jnp.float32)
    senders = jax.random.randint(k_s, (num_edges,), 0, num_nodes)
    receivers = jax.random.randint(k_r, (num_edges,), 0, num_nodes)

    params = init_params(k_p, input_dim, feature_dim, hidden_dim, num_core_layers)

    out = classical_gnn_forward(x, edge_attr, senders, receivers, params,
                                num_core_layers)
    jax.block_until_ready(out)
    assert out.shape == (1,)
    assert bool(jnp.all(jnp.isfinite(out)))
    print("KERNEL_OK")
</pallas_src>

<mosaic_0001>
module attributes {stable_mosaic.version = 11 : i64} {
  func.func @gnn_kernel(%arg0: memref<32x1xi32, #tpu.memory_space<vmem>>, %arg1: memref<32x1xi32, #tpu.memory_space<vmem>>, %arg2: memref<16x16xbf16, #tpu.memory_space<vmem>>, %arg3: memref<32x16xbf16, #tpu.memory_space<vmem>>, %arg4: memref<16x128xbf16, #tpu.memory_space<vmem>>, %arg5: memref<1x128xf32, #tpu.memory_space<vmem>>, %arg6: memref<16x128xbf16, #tpu.memory_space<vmem>>, %arg7: memref<1x128xf32, #tpu.memory_space<vmem>>, %arg8: memref<2x128x128xbf16, #tpu.memory_space<vmem>>, %arg9: memref<2x128x128xbf16, #tpu.memory_space<vmem>>, %arg10: memref<2x128x128xbf16, #tpu.memory_space<vmem>>, %arg11: memref<2x1x128xf32, #tpu.memory_space<vmem>>, %arg12: memref<2x128x128xbf16, #tpu.memory_space<vmem>>, %arg13: memref<2x1x128xf32, #tpu.memory_space<vmem>>, %arg14: memref<2x128x128xbf16, #tpu.memory_space<vmem>>, %arg15: memref<2x128x128xbf16, #tpu.memory_space<vmem>>, %arg16: memref<2x1x128xf32, #tpu.memory_space<vmem>>, %arg17: memref<2x128x128xbf16, #tpu.memory_space<vmem>>, %arg18: memref<2x1x128xf32, #tpu.memory_space<vmem>>, %arg19: memref<128x128xbf16, #tpu.memory_space<vmem>>, %arg20: memref<1x128xf32, #tpu.memory_space<vmem>>, %arg21: memref<128x128xbf16, #tpu.memory_space<vmem>>, %arg22: memref<1x128xf32, #tpu.memory_space<vmem>>, %arg23: memref<1x256xf32, #tpu.memory_space<vmem>>, %arg24: memref<1x1xf32, #tpu.memory_space<vmem>>, %arg25: memref<1x128xf32, #tpu.memory_space<vmem>>) attributes {dimension_semantics = [], scalar_prefetch = 0 : i64, scratch_operands = 0 : i64, tpu.core_type = #tpu.core_type<tc>} {
    %c0 = arith.constant 0 : index
    %c0_0 = arith.constant 0 : index
    %0 = vector.load %arg2[%c0, %c0_0] : memref<16x16xbf16, #tpu.memory_space<vmem>>, vector<16x16xbf16>
    %c0_1 = arith.constant 0 : index
    %c0_2 = arith.constant 0 : index
    %1 = vector.load %arg4[%c0_1, %c0_2] : memref<16x128xbf16, #tpu.memory_space<vmem>>, vector<16x128xbf16>
    %cst = arith.constant dense<0.000000e+00> : vector<16x128xf32>
    %2 = tpu.matmul %0, %1, %cst {dimension_numbers = #tpu.dot_dimension_numbers<[1], [0], [0], [1], [0, 0, 1, 1], [], []>} : vector<16x16xbf16>, vector<16x128xbf16>, vector<16x128xf32> -> vector<16x128xf32>
    %c0_3 = arith.constant 0 : index
    %c0_4 = arith.constant 0 : index
    %3 = vector.load %arg5[%c0_3, %c0_4] : memref<1x128xf32, #tpu.memory_space<vmem>>, vector<1x128xf32>
    %4 = vector.broadcast %3 : vector<1x128xf32> to vector<16x128xf32>
    %5 = arith.addf %2, %4 : vector<16x128xf32>
    %cst_5 = arith.constant 0.000000e+00 : f32
    %6 = vector.broadcast %cst_5 : f32 to vector<16x128xf32>
    %7 = arith.maximumf %5, %6 : vector<16x128xf32>
    %8 = arith.truncf %7 : vector<16x128xf32> to vector<16x128xbf16>
    %c0_6 = arith.constant 0 : index
    %c0_7 = arith.constant 0 : index
    %9 = vector.load %arg3[%c0_6, %c0_7] : memref<32x16xbf16, #tpu.memory_space<vmem>>, vector<32x16xbf16>
    %c0_8 = arith.constant 0 : index
    %c0_9 = arith.constant 0 : index
    %10 = vector.load %arg6[%c0_8, %c0_9] : memref<16x128xbf16, #tpu.memory_space<vmem>>, vector<16x128xbf16>
    %cst_10 = arith.constant dense<0.000000e+00> : vector<32x128xf32>
    %11 = tpu.matmul %9, %10, %cst_10 {dimension_numbers = #tpu.dot_dimension_numbers<[1], [0], [0], [1], [0, 0, 1, 1], [], []>} : vector<32x16xbf16>, vector<16x128xbf16>, vector<32x128xf32> -> vector<32x128xf32>
    %c0_11 = arith.constant 0 : index
    %c0_12 = arith.constant 0 : index
    %12 = vector.load %arg7[%c0_11, %c0_12] : memref<1x128xf32, #tpu.memory_space<vmem>>, vector<1x128xf32>
    %13 = vector.broadcast %12 : vector<1x128xf32> to vector<32x128xf32>
    %14 = arith.addf %11, %13 : vector<32x128xf32>
    %cst_13 = arith.constant 0.000000e+00 : f32
    %15 = vector.broadcast %cst_13 : f32 to vector<32x128xf32>
    %16 = arith.maximumf %14, %15 : vector<32x128xf32>
    %17 = arith.truncf %16 : vector<32x128xf32> to vector<32x128xbf16>
    %18 = tpu.iota {dimensions = array<i32: 1>} : vector<32x16xi32>
    %c0_14 = arith.constant 0 : index
    %c0_15 = arith.constant 0 : index
    %19 = vector.load %arg0[%c0_14, %c0_15] : memref<32x1xi32, #tpu.memory_space<vmem>>, vector<32x1xi32>
    %20 = vector.broadcast %19 : vector<32x1xi32> to vector<32x16xi32>
    %21 = arith.cmpi eq, %20, %18 : vector<32x16xi32>
    %22 = arith.extui %21 : vector<32x16xi1> to vector<32x16xi32>
    %23 = arith.sitofp %22 : vector<32x16xi32> to vector<32x16xf32>
    %24 = arith.truncf %23 : vector<32x16xf32> to vector<32x16xbf16>
    %c0_16 = arith.constant 0 : index
    %c0_17 = arith.constant 0 : index
    %25 = vector.load %arg1[%c0_16, %c0_17] : memref<32x1xi32, #tpu.memory_space<vmem>>, vector<32x1xi32>
    %26 = vector.broadcast %25 : vector<32x1xi32> to vector<32x16xi32>
    %27 = arith.cmpi eq, %26, %18 : vector<32x16xi32>
    %28 = arith.extui %27 : vector<32x16xi1> to vector<32x16xi32>
    %29 = arith.sitofp %28 : vector<32x16xi32> to vector<32x16xf32>
    %30 = arith.truncf %29 : vector<32x16xf32> to vector<32x16xbf16>
    %c0_i32 = arith.constant 0 : i32
    %31 = arith.index_cast %c0_i32 : i32 to index
    %c0_18 = arith.constant 0 : index
    %c0_19 = arith.constant 0 : index
    %32 = vector.load %arg9[%31, %c0_18, %c0_19] : memref<2x128x128xbf16, #tpu.memory_space<vmem>>, vector<1x128x128xbf16>
    %33 = vector.shape_cast %32 : vector<1x128x128xbf16> to vector<128x128xbf16>
    %cst_20 = arith.constant dense<0.000000e+00> : vector<16x128xf32>
    %34 = tpu.matmul %8, %33, %cst_20 {dimension_numbers = #tpu.dot_dimension_numbers<[1], [0], [0], [1], [0, 0, 1, 1], [], []>} : vector<16x128xbf16>, vector<128x128xbf16>, vector<16x128xf32> -> vector<16x128xf32>
    %35 = arith.truncf %34 : vector<16x128xf32> to vector<16x128xbf16>
    %36 = arith.index_cast %c0_i32 : i32 to index
    %c0_21 = arith.constant 0 : index
    %c0_22 = arith.constant 0 : index
    %37 = vector.load %arg10[%36, %c0_21, %c0_22] : memref<2x128x128xbf16, #tpu.memory_space<vmem>>, vector<1x128x128xbf16>
    %38 = vector.shape_cast %37 : vector<1x128x128xbf16> to vector<128x128xbf16>
    %cst_23 = arith.constant dense<0.000000e+00> : vector<16x128xf32>
    %39 = tpu.matmul %8, %38, %cst_23 {dimension_numbers = #tpu.dot_dimension_numbers<[1], [0], [0], [1], [0, 0, 1, 1], [], []>} : vector<16x128xbf16>, vector<128x128xbf16>, vector<16x128xf32> -> vector<16x128xf32>
    %40 = arith.truncf %39 : vector<16x128xf32> to vector<16x128xbf16>
    %41 = arith.index_cast %c0_i32 : i32 to index
    %c0_24 = arith.constant 0 : index
    %c0_25 = arith.constant 0 : index
    %42 = vector.load %arg8[%41, %c0_24, %c0_25] : memref<2x128x128xbf16, #tpu.memory_space<vmem>>, vector<1x128x128xbf16>
    %43 = vector.shape_cast %42 : vector<1x128x128xbf16> to vector<128x128xbf16>
    %cst_26 = arith.constant dense<0.000000e+00> : vector<32x128xf32>
    %44 = tpu.matmul %17, %43, %cst_26 {dimension_numbers = #tpu.dot_dimension_numbers<[1], [0], [0], [1], [0, 0, 1, 1], [], []>} : vector<32x128xbf16>, vector<128x128xbf16>, vector<32x128xf32> -> vector<32x128xf32>
    %cst_27 = arith.constant dense<0.000000e+00> : vector<32x128xf32>
    %45 = tpu.matmul %24, %35, %cst_27 {dimension_numbers = #tpu.dot_dimension_numbers<[1], [0], [0], [1], [0, 0, 1, 1], [], []>} : vector<32x16xbf16>, vector<16x128xbf16>, vector<32x128xf32> -> vector<32x128xf32>
    %46 = arith.addf %44, %45 : vector<32x128xf32>
    %cst_28 = arith.constant dense<0.000000e+00> : vector<32x128xf32>
    %47 = tpu.matmul %30, %40, %cst_28 {dimension_numbers = #tpu.dot_dimension_numbers<[1], [0], [0], [1], [0, 0, 1, 1], [], []>} : vector<32x16xbf16>, vector<16x128xbf16>, vector<32x128xf32> -> vector<32x128xf32>
    %48 = arith.addf %46, %47 : vector<32x128xf32>
    %49 = arith.index_cast %c0_i32 : i32 to index
    %c0_29 = arith.constant 0 : index
    %c0_30 = arith.constant 0 : index
    %50 = vector.load %arg11[%49, %c0_29, %c0_30] : memref<2x1x128xf32, #tpu.memory_space<vmem>>, vector<1x1x128xf32>
    %51 = vector.shape_cast %50 : vector<1x1x128xf32> to vector<1x128xf32>
    %52 = vector.broadcast %51 : vector<1x128xf32> to vector<32x128xf32>
    %53 = arith.addf %48, %52 : vector<32x128xf32>
    %cst_31 = arith.constant 0.000000e+00 : f32
    %54 = vector.broadcast %cst_31 : f32 to vector<32x128xf32>
    %55 = arith.maximumf %53, %54 : vector<32x128xf32>
    %56 = arith.truncf %55 : vector<32x128xf32> to vector<32x128xbf16>
    %57 = arith.index_cast %c0_i32 : i32 to index
    %c0_32 = arith.constant 0 : index
    %c0_33 = arith.constant 0 : index
    %58 = vector.load %arg12[%57, %c0_32, %c0_33] : memref<2x128x128xbf16, #tpu.memory_space<vmem>>, vector<1x128x128xbf16>
    %59 = vector.shape_cast %58 : vector<1x128x128xbf16> to vector<128x128xbf16>
    %cst_34 = arith.constant dense<0.000000e+00> : vector<32x128xf32>
    %60 = tpu.matmul %56, %59, %cst_34 {dimension_numbers = #tpu.dot_dimension_numbers<[1], [0], [0], [1], [0, 0, 1, 1], [], []>} : vector<32x128xbf16>, vector<128x128xbf16>, vector<32x128xf32> -> vector<32x128xf32>
    %61 = arith.index_cast %c0_i32 : i32 to index
    %c0_35 = arith.constant 0 : index
    %c0_36 = arith.constant 0 : index
    %62 = vector.load %arg13[%61, %c0_35, %c0_36] : memref<2x1x128xf32, #tpu.memory_space<vmem>>, vector<1x1x128xf32>
    %63 = vector.shape_cast %62 : vector<1x1x128xf32> to vector<1x128xf32>
    %64 = vector.broadcast %63 : vector<1x128xf32> to vector<32x128xf32>
    %65 = arith.addf %60, %64 : vector<32x128xf32>
    %cst_37 = arith.constant 0.000000e+00 : f32
    %66 = vector.broadcast %cst_37 : f32 to vector<32x128xf32>
    %67 = arith.maximumf %65, %66 : vector<32x128xf32>
    %68 = arith.truncf %67 : vector<32x128xf32> to vector<32x128xbf16>
    %cst_38 = arith.constant dense<0.000000e+00> : vector<16x128xf32>
    %69 = tpu.matmul %30, %68, %cst_38 {dimension_numbers = #tpu.dot_dimension_numbers<[0], [0], [1], [1], [0, 1, 1, 1], [], []>} : vector<32x16xbf16>, vector<32x128xbf16>, vector<16x128xf32> -> vector<16x128xf32>
    %70 = arith.truncf %69 : vector<16x128xf32> to vector<16x128xbf16>
    %71 = arith.index_cast %c0_i32 : i32 to index
    %c0_39 = arith.constant 0 : index
    %c0_40 = arith.constant 0 : index
    %72 = vector.load %arg14[%71, %c0_39, %c0_40] : memref<2x128x128xbf16, #tpu.memory_space<vmem>>, vector<1x128x128xbf16>
    %73 = vector.shape_cast %72 : vector<1x128x128xbf16> to vector<128x128xbf16>
    %cst_41 = arith.constant dense<0.000000e+00> : vector<16x128xf32>
    %74 = tpu.matmul %8, %73, %cst_41 {dimension_numbers = #tpu.dot_dimension_numbers<[1], [0], [0], [1], [0, 0, 1, 1], [], []>} : vector<16x128xbf16>, vector<128x128xbf16>, vector<16x128xf32> -> vector<16x128xf32>
    %75 = arith.index_cast %c0_i32 : i32 to index
    %c0_42 = arith.constant 0 : index
    %c0_43 = arith.constant 0 : index
    %76 = vector.load %arg15[%75, %c0_42, %c0_43] : memref<2x128x128xbf16, #tpu.memory_space<vmem>>, vector<1x128x128xbf16>
    %77 = vector.shape_cast %76 : vector<1x128x128xbf16> to vector<128x128xbf16>
    %cst_44 = arith.constant dense<0.000000e+00> : vector<16x128xf32>
    %78 = tpu.matmul %70, %77, %cst_44 {dimension_numbers = #tpu.dot_dimension_numbers<[1], [0], [0], [1], [0, 0, 1, 1], [], []>} : vector<16x128xbf16>, vector<128x128xbf16>, vector<16x128xf32> -> vector<16x128xf32>
    %79 = arith.addf %74, %78 : vector<16x128xf32>
    %80 = arith.index_cast %c0_i32 : i32 to index
    %c0_45 = arith.constant 0 : index
    %c0_46 = arith.constant 0 : index
    %81 = vector.load %arg16[%80, %c0_45, %c0_46] : memref<2x1x128xf32, #tpu.memory_space<vmem>>, vector<1x1x128xf32>
    %82 = vector.shape_cast %81 : vector<1x1x128xf32> to vector<1x128xf32>
    %83 = vector.broadcast %82 : vector<1x128xf32> to vector<16x128xf32>
    %84 = arith.addf %79, %83 : vector<16x128xf32>
    %cst_47 = arith.constant 0.000000e+00 : f32
    %85 = vector.broadcast %cst_47 : f32 to vector<16x128xf32>
    %86 = arith.maximumf %84, %85 : vector<16x128xf32>
    %87 = arith.truncf %86 : vector<16x128xf32> to vector<16x128xbf16>
    %88 = arith.index_cast %c0_i32 : i32 to index
    %c0_48 = arith.constant 0 : index
    %c0_49 = arith.constant 0 : index
    %89 = vector.load %arg17[%88, %c0_48, %c0_49] : memref<2x128x128xbf16, #tpu.memory_space<vmem>>, vector<1x128x128xbf16>
    %90 = vector.shape_cast %89 : vector<1x128x128xbf16> to vector<128x128xbf16>
    %cst_50 = arith.constant dense<0.000000e+00> : vector<16x128xf32>
    %91 = tpu.matmul %87, %90, %cst_50 {dimension_numbers = #tpu.dot_dimension_numbers<[1], [0], [0], [1], [0, 0, 1, 1], [], []>} : vector<16x128xbf16>, vector<128x128xbf16>, vector<16x128xf32> -> vector<16x128xf32>
    %92 = arith.index_cast %c0_i32 : i32 to index
    %c0_51 = arith.constant 0 : index
    %c0_52 = arith.constant 0 : index
    %93 = vector.load %arg18[%92, %c0_51, %c0_52] : memref<2x1x128xf32, #tpu.memory_space<vmem>>, vector<1x1x128xf32>
    %94 = vector.shape_cast %93 : vector<1x1x128xf32> to vector<1x128xf32>
    %95 = vector.broadcast %94 : vector<1x128xf32> to vector<16x128xf32>
    %96 = arith.addf %91, %95 : vector<16x128xf32>
    %cst_53 = arith.constant 0.000000e+00 : f32
    %97 = vector.broadcast %cst_53 : f32 to vector<16x128xf32>
    %98 = arith.maximumf %96, %97 : vector<16x128xf32>
    %99 = arith.truncf %98 : vector<16x128xf32> to vector<16x128xbf16>
    %c1_i32 = arith.constant 1 : i32
    %100 = arith.index_cast %c1_i32 : i32 to index
    %c0_54 = arith.constant 0 : index
    %c0_55 = arith.constant 0 : index
    %101 = vector.load %arg9[%100, %c0_54, %c0_55] : memref<2x128x128xbf16, #tpu.memory_space<vmem>>, vector<1x128x128xbf16>
    %102 = vector.shape_cast %101 : vector<1x128x128xbf16> to vector<128x128xbf16>
    %cst_56 = arith.constant dense<0.000000e+00> : vector<16x128xf32>
    %103 = tpu.matmul %99, %102, %cst_56 {dimension_numbers = #tpu.dot_dimension_numbers<[1], [0], [0], [1], [0, 0, 1, 1], [], []>} : vector<16x128xbf16>, vector<128x128xbf16>, vector<16x128xf32> -> vector<16x128xf32>
    %104 = arith.truncf %103 : vector<16x128xf32> to vector<16x128xbf16>
    %105 = arith.index_cast %c1_i32 : i32 to index
    %c0_57 = arith.constant 0 : index
    %c0_58 = arith.constant 0 : index
    %106 = vector.load %arg10[%105, %c0_57, %c0_58] : memref<2x128x128xbf16, #tpu.memory_space<vmem>>, vector<1x128x128xbf16>
    %107 = vector.shape_cast %106 : vector<1x128x128xbf16> to vector<128x128xbf16>
    %cst_59 = arith.constant dense<0.000000e+00> : vector<16x128xf32>
    %108 = tpu.matmul %99, %107, %cst_59 {dimension_numbers = #tpu.dot_dimension_numbers<[1], [0], [0], [1], [0, 0, 1, 1], [], []>} : vector<16x128xbf16>, vector<128x128xbf16>, vector<16x128xf32> -> vector<16x128xf32>
    %109 = arith.truncf %108 : vector<16x128xf32> to vector<16x128xbf16>
    %110 = arith.index_cast %c1_i32 : i32 to index
    %c0_60 = arith.constant 0 : index
    %c0_61 = arith.constant 0 : index
    %111 = vector.load %arg8[%110, %c0_60, %c0_61] : memref<2x128x128xbf16, #tpu.memory_space<vmem>>, vector<1x128x128xbf16>
    %112 = vector.shape_cast %111 : vector<1x128x128xbf16> to vector<128x128xbf16>
    %cst_62 = arith.constant dense<0.000000e+00> : vector<32x128xf32>
    %113 = tpu.matmul %68, %112, %cst_62 {dimension_numbers = #tpu.dot_dimension_numbers<[1], [0], [0], [1], [0, 0, 1, 1], [], []>} : vector<32x128xbf16>, vector<128x128xbf16>, vector<32x128xf32> -> vector<32x128xf32>
    %cst_63 = arith.constant dense<0.000000e+00> : vector<32x128xf32>
    %114 = tpu.matmul %24, %104, %cst_63 {dimension_numbers = #tpu.dot_dimension_numbers<[1], [0], [0], [1], [0, 0, 1, 1], [], []>} : vector<32x16xbf16>, vector<16x128xbf16>, vector<32x128xf32> -> vector<32x128xf32>
    %115 = arith.addf %113, %114 : vector<32x128xf32>
    %cst_64 = arith.constant dense<0.000000e+00> : vector<32x128xf32>
    %116 = tpu.matmul %30, %109, %cst_64 {dimension_numbers = #tpu.dot_dimension_numbers<[1], [0], [0], [1], [0, 0, 1, 1], [], []>} : vector<32x16xbf16>, vector<16x128xbf16>, vector<32x128xf32> -> vector<32x128xf32>
    %117 = arith.addf %115, %116 : vector<32x128xf32>
    %118 = arith.index_cast %c1_i32 : i32 to index
    %c0_65 = arith.constant 0 : index
    %c0_66 = arith.constant 0 : index
    %119 = vector.load %arg11[%118, %c0_65, %c0_66] : memref<2x1x128xf32, #tpu.memory_space<vmem>>, vector<1x1x128xf32>
    %120 = vector.shape_cast %119 : vector<1x1x128xf32> to vector<1x128xf32>
    %121 = vector.broadcast %120 : vector<1x128xf32> to vector<32x128xf32>
    %122 = arith.addf %117, %121 : vector<32x128xf32>
    %cst_67 = arith.constant 0.000000e+00 : f32
    %123 = vector.broadcast %cst_67 : f32 to vector<32x128xf32>
    %124 = arith.maximumf %122, %123 : vector<32x128xf32>
    %125 = arith.truncf %124 : vector<32x128xf32> to vector<32x128xbf16>
    %126 = arith.index_cast %c1_i32 : i32 to index
    %c0_68 = arith.constant 0 : index
    %c0_69 = arith.constant 0 : index
    %127 = vector.load %arg12[%126, %c0_68, %c0_69] : memref<2x128x128xbf16, #tpu.memory_space<vmem>>, vector<1x128x128xbf16>
    %128 = vector.shape_cast %127 : vector<1x128x128xbf16> to vector<128x128xbf16>
    %cst_70 = arith.constant dense<0.000000e+00> : vector<32x128xf32>
    %129 = tpu.matmul %125, %128, %cst_70 {dimension_numbers = #tpu.dot_dimension_numbers<[1], [0], [0], [1], [0, 0, 1, 1], [], []>} : vector<32x128xbf16>, vector<128x128xbf16>, vector<32x128xf32> -> vector<32x128xf32>
    %130 = arith.index_cast %c1_i32 : i32 to index
    %c0_71 = arith.constant 0 : index
    %c0_72 = arith.constant 0 : index
    %131 = vector.load %arg13[%130, %c0_71, %c0_72] : memref<2x1x128xf32, #tpu.memory_space<vmem>>, vector<1x1x128xf32>
    %132 = vector.shape_cast %131 : vector<1x1x128xf32> to vector<1x128xf32>
    %133 = vector.broadcast %132 : vector<1x128xf32> to vector<32x128xf32>
    %134 = arith.addf %129, %133 : vector<32x128xf32>
    %cst_73 = arith.constant 0.000000e+00 : f32
    %135 = vector.broadcast %cst_73 : f32 to vector<32x128xf32>
    %136 = arith.maximumf %134, %135 : vector<32x128xf32>
    %137 = arith.truncf %136 : vector<32x128xf32> to vector<32x128xbf16>
    %cst_74 = arith.constant dense<0.000000e+00> : vector<16x128xf32>
    %138 = tpu.matmul %30, %137, %cst_74 {dimension_numbers = #tpu.dot_dimension_numbers<[0], [0], [1], [1], [0, 1, 1, 1], [], []>} : vector<32x16xbf16>, vector<32x128xbf16>, vector<16x128xf32> -> vector<16x128xf32>
    %139 = arith.truncf %138 : vector<16x128xf32> to vector<16x128xbf16>
    %140 = arith.index_cast %c1_i32 : i32 to index
    %c0_75 = arith.constant 0 : index
    %c0_76 = arith.constant 0 : index
    %141 = vector.load %arg14[%140, %c0_75, %c0_76] : memref<2x128x128xbf16, #tpu.memory_space<vmem>>, vector<1x128x128xbf16>
    %142 = vector.shape_cast %141 : vector<1x128x128xbf16> to vector<128x128xbf16>
    %cst_77 = arith.constant dense<0.000000e+00> : vector<16x128xf32>
    %143 = tpu.matmul %99, %142, %cst_77 {dimension_numbers = #tpu.dot_dimension_numbers<[1], [0], [0], [1], [0, 0, 1, 1], [], []>} : vector<16x128xbf16>, vector<128x128xbf16>, vector<16x128xf32> -> vector<16x128xf32>
    %144 = arith.index_cast %c1_i32 : i32 to index
    %c0_78 = arith.constant 0 : index
    %c0_79 = arith.constant 0 : index
    %145 = vector.load %arg15[%144, %c0_78, %c0_79] : memref<2x128x128xbf16, #tpu.memory_space<vmem>>, vector<1x128x128xbf16>
    %146 = vector.shape_cast %145 : vector<1x128x128xbf16> to vector<128x128xbf16>
    %cst_80 = arith.constant dense<0.000000e+00> : vector<16x128xf32>
    %147 = tpu.matmul %139, %146, %cst_80 {dimension_numbers = #tpu.dot_dimension_numbers<[1], [0], [0], [1], [0, 0, 1, 1], [], []>} : vector<16x128xbf16>, vector<128x128xbf16>, vector<16x128xf32> -> vector<16x128xf32>
    %148 = arith.addf %143, %147 : vector<16x128xf32>
    %149 = arith.index_cast %c1_i32 : i32 to index
    %c0_81 = arith.constant 0 : index
    %c0_82 = arith.constant 0 : index
    %150 = vector.load %arg16[%149, %c0_81, %c0_82] : memref<2x1x128xf32, #tpu.memory_space<vmem>>, vector<1x1x128xf32>
    %151 = vector.shape_cast %150 : vector<1x1x128xf32> to vector<1x128xf32>
    %152 = vector.broadcast %151 : vector<1x128xf32> to vector<16x128xf32>
    %153 = arith.addf %148, %152 : vector<16x128xf32>
    %cst_83 = arith.constant 0.000000e+00 : f32
    %154 = vector.broadcast %cst_83 : f32 to vector<16x128xf32>
    %155 = arith.maximumf %153, %154 : vector<16x128xf32>
    %156 = arith.truncf %155 : vector<16x128xf32> to vector<16x128xbf16>
    %157 = arith.index_cast %c1_i32 : i32 to index
    %c0_84 = arith.constant 0 : index
    %c0_85 = arith.constant 0 : index
    %158 = vector.load %arg17[%157, %c0_84, %c0_85] : memref<2x128x128xbf16, #tpu.memory_space<vmem>>, vector<1x128x128xbf16>
    %159 = vector.shape_cast %158 : vector<1x128x128xbf16> to vector<128x128xbf16>
    %cst_86 = arith.constant dense<0.000000e+00> : vector<16x128xf32>
    %160 = tpu.matmul %156, %159, %cst_86 {dimension_numbers = #tpu.dot_dimension_numbers<[1], [0], [0], [1], [0, 0, 1, 1], [], []>} : vector<16x128xbf16>, vector<128x128xbf16>, vector<16x128xf32> -> vector<16x128xf32>
    %161 = arith.index_cast %c1_i32 : i32 to index
    %c0_87 = arith.constant 0 : index
    %c0_88 = arith.constant 0 : index
    %162 = vector.load %arg18[%161, %c0_87, %c0_88] : memref<2x1x128xf32, #tpu.memory_space<vmem>>, vector<1x1x128xf32>
    %163 = vector.shape_cast %162 : vector<1x1x128xf32> to vector<1x128xf32>
    %164 = vector.broadcast %163 : vector<1x128xf32> to vector<16x128xf32>
    %165 = arith.addf %160, %164 : vector<16x128xf32>
    %cst_89 = arith.constant 0.000000e+00 : f32
    %166 = vector.broadcast %cst_89 : f32 to vector<16x128xf32>
    %167 = arith.maximumf %165, %166 : vector<16x128xf32>
    %168 = arith.truncf %167 : vector<16x128xf32> to vector<16x128xbf16>
    %c2_i32 = arith.constant 2 : i32
    %169 = arith.extf %168 : vector<16x128xbf16> to vector<16x128xf32>
    %cst_90 = arith.constant dense<0.000000e+00> : vector<128xf32>
    %170 = vector.multi_reduction <add>, %169, %cst_90 [0] : vector<16x128xf32> to vector<128xf32>
    %171 = vector.shape_cast %170 : vector<128xf32> to vector<1x128xf32>
    %172 = arith.truncf %171 : vector<1x128xf32> to vector<1x128xbf16>
    %173 = arith.extf %137 : vector<32x128xbf16> to vector<32x128xf32>
    %cst_91 = arith.constant dense<0.000000e+00> : vector<128xf32>
    %174 = vector.multi_reduction <add>, %173, %cst_91 [0] : vector<32x128xf32> to vector<128xf32>
    %175 = vector.shape_cast %174 : vector<128xf32> to vector<1x128xf32>
    %176 = arith.truncf %175 : vector<1x128xf32> to vector<1x128xbf16>
    %c0_92 = arith.constant 0 : index
    %c0_93 = arith.constant 0 : index
    %177 = vector.load %arg19[%c0_92, %c0_93] : memref<128x128xbf16, #tpu.memory_space<vmem>>, vector<128x128xbf16>
    %cst_94 = arith.constant dense<0.000000e+00> : vector<1x128xf32>
    %178 = tpu.matmul %172, %177, %cst_94 {dimension_numbers = #tpu.dot_dimension_numbers<[1], [0], [0], [1], [0, 0, 1, 1], [], []>} : vector<1x128xbf16>, vector<128x128xbf16>, vector<1x128xf32> -> vector<1x128xf32>
    %c0_95 = arith.constant 0 : index
    %c0_96 = arith.constant 0 : index
    %179 = vector.load %arg20[%c0_95, %c0_96] : memref<1x128xf32, #tpu.memory_space<vmem>>, vector<1x128xf32>
    %cst_97 = arith.constant 1.600000e+01 : f32
    %180 = vector.broadcast %cst_97 : f32 to vector<1x128xf32>
    %181 = arith.mulf %180, %179 : vector<1x128xf32>
    %182 = arith.addf %178, %181 : vector<1x128xf32>
    %c0_98 = arith.constant 0 : index
    %c0_99 = arith.constant 0 : index
    %183 = vector.load %arg21[%c0_98, %c0_99] : memref<128x128xbf16, #tpu.memory_space<vmem>>, vector<128x128xbf16>
    %cst_100 = arith.constant dense<0.000000e+00> : vector<1x128xf32>
    %184 = tpu.matmul %176, %183, %cst_100 {dimension_numbers = #tpu.dot_dimension_numbers<[1], [0], [0], [1], [0, 0, 1, 1], [], []>} : vector<1x128xbf16>, vector<128x128xbf16>, vector<1x128xf32> -> vector<1x128xf32>
    %c0_101 = arith.constant 0 : index
    %c0_102 = arith.constant 0 : index
    %185 = vector.load %arg22[%c0_101, %c0_102] : memref<1x128xf32, #tpu.memory_space<vmem>>, vector<1x128xf32>
    %cst_103 = arith.constant 3.200000e+01 : f32
    %186 = vector.broadcast %cst_103 : f32 to vector<1x128xf32>
    %187 = arith.mulf %186, %185 : vector<1x128xf32>
    %188 = arith.addf %184, %187 : vector<1x128xf32>
    %c0_104 = arith.constant 0 : index
    %c0_105 = arith.constant 0 : index
    %189 = vector.load %arg23[%c0_104, %c0_105] : memref<1x256xf32, #tpu.memory_space<vmem>>, vector<1x256xf32>
    %190 = vector.extract_strided_slice %189 {offsets = [0, 0], sizes = [1, 128], strides = [1, 1]} : vector<1x256xf32> to vector<1x128xf32>
    %191 = arith.mulf %188, %190 : vector<1x128xf32>
    %cst_106 = arith.constant dense<0.000000e+00> : vector<1xf32>
    %192 = vector.multi_reduction <add>, %191, %cst_106 [1] : vector<1x128xf32> to vector<1xf32>
    %193 = vector.shape_cast %192 : vector<1xf32> to vector<1x1xf32>
    %194 = vector.extract_strided_slice %189 {offsets = [0, 128], sizes = [1, 128], strides = [1, 1]} : vector<1x256xf32> to vector<1x128xf32>
    %195 = arith.mulf %182, %194 : vector<1x128xf32>
    %cst_107 = arith.constant dense<0.000000e+00> : vector<1xf32>
    %196 = vector.multi_reduction <add>, %195, %cst_107 [1] : vector<1x128xf32> to vector<1xf32>
    %197 = vector.shape_cast %196 : vector<1xf32> to vector<1x1xf32>
    %198 = arith.addf %193, %197 : vector<1x1xf32>
    %c0_108 = arith.constant 0 : index
    %c0_109 = arith.constant 0 : index
    %199 = vector.load %arg24[%c0_108, %c0_109] : memref<1x1xf32, #tpu.memory_space<vmem>>, vector<1x1xf32>
    %200 = arith.addf %198, %199 : vector<1x1xf32>
    %201 = arith.negf %200 : vector<1x1xf32>
    %202 = math.exp %201 : vector<1x1xf32>
    %cst_110 = arith.constant 1.000000e+00 : f32
    %203 = vector.broadcast %cst_110 : f32 to vector<1x1xf32>
    %204 = arith.addf %203, %202 : vector<1x1xf32>
    %205 = arith.divf %203, %204 : vector<1x1xf32>
    %206 = vector.shape_cast %205 : vector<1x1xf32> to vector<1x1xf32>
    %207 = vector.broadcast %206 : vector<1x1xf32> to vector<1x128xf32>
    %c0_111 = arith.constant 0 : index
    %c0_112 = arith.constant 0 : index
    %208 = vector.load %arg25[%c0_111, %c0_112] : memref<1x128xf32, #tpu.memory_space<vmem>>, vector<1x128xf32>
    tpu.vector_store %arg25[%c0_111, %c0_112], %207 {strides = array<i32>} : memref<1x128xf32, #tpu.memory_space<vmem>>, vector<1x128xf32>,
    return
  }
}

</mosaic_0001>

<llo_original>
// kernel: tpu_custom_call.1
$region0: #{tpu_custom_call.1}
  #allocation0 [shape = 'u32[]', space=smem, size = 0x4, offset = 0x4, fixed_abs, tag = 'smem constant byte address 0x4 - core index']
  #allocation1 [shape = 'u32[144,128]{1,0:T(1,128)}', space=vmem, size = 0x12000, scoped, tag = 'internal scratch']
  #allocation2 [shape = 'f32[1,1]{1,0:T(1,128)S(1)}', space=vmem, size = 0x200, scoped, tag = 'scoped memory for tpu_custom_call.1']
  %s0 = inlined_call_operand.vmem [shape: s32[32,1], index: 0, kind: input, shape index: {}]
  %s1 = inlined_call_operand.vmem [shape: s32[32,1], index: 1, kind: input, shape index: {}]
  %s2 = inlined_call_operand.hbm [shape: bf16[16,16], index: 2, kind: input, shape index: {}]
  %s3 = inlined_call_operand.vmem [shape: bf16[32,16], index: 3, kind: input, shape index: {}]
  %s4 = inlined_call_operand.hbm [shape: bf16[16,128], index: 4, kind: input, shape index: {}]
  %s5 = inlined_call_operand.vmem [shape: f32[1,128], index: 5, kind: input, shape index: {}]
  %s6 = inlined_call_operand.hbm [shape: bf16[16,128], index: 6, kind: input, shape index: {}]
  %s7 = inlined_call_operand.hbm [shape: f32[1,128], index: 7, kind: input, shape index: {}]
  %s8 = inlined_call_operand.hbm [shape: bf16[2,128,128], index: 8, kind: input, shape index: {}]
  %s9 = inlined_call_operand.hbm [shape: bf16[2,128,128], index: 9, kind: input, shape index: {}]
  %s10 = inlined_call_operand.vmem [shape: bf16[2,128,128], index: 10, kind: input, shape index: {}]
  %s11 = inlined_call_operand.vmem [shape: f32[2,1,128], index: 11, kind: input, shape index: {}]
  %s12 = inlined_call_operand.hbm [shape: bf16[2,128,128], index: 12, kind: input, shape index: {}]
  %s13 = inlined_call_operand.vmem [shape: f32[2,1,128], index: 13, kind: input, shape index: {}]
  %s14 = inlined_call_operand.hbm [shape: bf16[2,128,128], index: 14, kind: input, shape index: {}]
  %s15 = inlined_call_operand.hbm [shape: bf16[2,128,128], index: 15, kind: input, shape index: {}]
  %s16 = inlined_call_operand.vmem [shape: f32[2,1,128], index: 16, kind: input, shape index: {}]
  %s17 = inlined_call_operand.hbm [shape: bf16[2,128,128], index: 17, kind: input, shape index: {}]
  %s18 = inlined_call_operand.vmem [shape: f32[2,1,128], index: 18, kind: input, shape index: {}]
  %s19 = inlined_call_operand.hbm [shape: bf16[128,128], index: 19, kind: input, shape index: {}]
  %s20 = inlined_call_operand.vmem [shape: f32[1,128], index: 20, kind: input, shape index: {}]
  %s21 = inlined_call_operand.hbm [shape: bf16[128,128], index: 21, kind: input, shape index: {}]
  %s22 = inlined_call_operand.vmem [shape: f32[1,128], index: 22, kind: input, shape index: {}]
  %s23 = inlined_call_operand.vmem [shape: f32[1,256], index: 23, kind: input, shape index: {}]
  %s24 = inlined_call_operand.<no memory space> [shape: f32[1,1], index: 24, kind: input, shape index: {}]
  %s25 = inlined_call_operand.hbm [shape: f32[1,128], index: 25, kind: output, shape index: {}]
  %s26 = sld [smem:[#allocation0]]
  $region158: #{tpu_custom_call.1} parent=0
    _
  %s28 = ssub.s32 1, %s26
  %s29 = scalar_select 0, %s28, %s26
  %v30 = vstv %s24
  %31 = vst [vmem:[#allocation2] sm:$0x1] %v30
  $region1: #{tpu_custom_call.1} parent=0
    #allocation3 [shape = 'u8[4096]{0}', space=vmem, size = 0x1000, scoped, tag = 'input window, operand 2, single buffered']
    #allocation4 [shape = 's32[1]{0}', space=sflag, size = 0x4, scoped, tag = 'scoped memory for tpu_custom_call.1']
    #allocation5 [shape = 's32[1]{0}', space=sflag, size = 0x4, scoped, tag = 'scoped memory for tpu_custom_call.1']
    #allocation6 [shape = 'u8[4096]{0}', space=vmem, size = 0x1000, scoped, tag = 'input window, operand 4, single buffered']
    #allocation7 [shape = 's32[1]{0}', space=sflag, size = 0x4, scoped, tag = 'scoped memory for tpu_custom_call.1']
    #allocation8 [shape = 'u8[4096]{0}', space=vmem, size = 0x1000, scoped, tag = 'input window, operand 6, single buffered']
    #allocation9 [shape = 'u8[512]{0}', space=vmem, size = 0x400, scoped, tag = 'input window, operand 7, single buffered']
    #allocation10 [shape = 's32[1]{0}', space=sflag, size = 0x4, scoped, tag = 'scoped memory for tpu_custom_call.1']
    #allocation11 [shape = 'u8[65536]{0}', space=vmem, size = 0x10000, scoped, tag = 'input window, operand 8, single buffered']
    #allocation12 [shape = 'u8[65536]{0}', space=vmem, size = 0x10000, scoped, tag = 'input window, operand 9, single buffered']
    #allocation13 [shape = 's32[1]{0}', space=sflag, size = 0x4, scoped, tag = 'scoped memory for tpu_custom_call.1']
    #allocation14 [shape = 'u8[65536]{0}', space=vmem, size = 0x10000, scoped, tag = 'input window, operand 12, single buffered']
    #allocation15 [shape = 'u8[65536]{0}', space=vmem, size = 0x10000, scoped, tag = 'input window, operand 14, single buffered']
    #allocation16 [shape = 's32[1]{0}', space=sflag, size = 0x4, scoped, tag = 'scoped memory for tpu_custom_call.1']
    #allocation17 [shape = 'u8[65536]{0}', space=vmem, size = 0x10000, scoped, tag = 'input window, operand 15, single buffered']
    #allocation18 [shape = 'u8[65536]{0}', space=vmem, size = 0x10000, scoped, tag = 'input window, operand 17, single buffered']
    #allocation19 [shape = 's32[1]{0}', space=sflag, size = 0x4, scoped, tag = 'scoped memory for tpu_custom_call.1']
    #allocation20 [shape = 'u8[32768]{0}', space=vmem, size = 0x8000, scoped, tag = 'input window, operand 19, single buffered']
    #allocation21 [shape = 'u8[32768]{0}', space=vmem, size = 0x8000, scoped, tag = 'input window, operand 21, single buffered']
    #allocation22 [shape = 's32[1]{0}', space=sflag, size = 0x4, scoped, tag = 'scoped memory for tpu_custom_call.1']
    #allocation23 [shape = 'u8[512]{0}', space=vmem, size = 0x400, scoped, tag = 'output window, operand 0, single buffered']
    %32 = vsyncpa [#allocation4], 0
    %33 = vsyncpa [#allocation7], 0
    %34 = vsyncpa [#allocation10], 0
    %35 = vsyncpa [#allocation13], 0
    %36 = vsyncpa [#allocation16], 0
    %37 = vsyncpa [#allocation19], 0
    %38 = vsyncpa [#allocation22], 0
    %39 = vsyncpa [#allocation5], 0
    // Predicated region
    $region2: #{tpu_custom_call.1} parent=1 // pred_check
      _
    $region3: #{tpu_custom_call.1} parent=1 // pred_check_branch
      %41 = sbr.rel (0) target = $region5
    $region4: #{tpu_custom_call.1} parent=1 // pred_region
      _
    $region5: #{tpu_custom_call.1} parent=1 // pred_fallthru
      _
    // Predicated region
    $region6: #{tpu_custom_call.1} parent=1 // pred_check
      _
    $region7: #{tpu_custom_call.1} parent=1 // pred_check_branch
      %43 = sbr.rel (0) target = $region9
    $region8: #{tpu_custom_call.1} parent=1 // pred_region
      _
    $region9: #{tpu_custom_call.1} parent=1 // pred_fallthru
      _
    // Predicated region
    $region10: #{tpu_custom_call.1} parent=1 // pred_check
      _
    $region11: #{tpu_custom_call.1} parent=1 // pred_check_branch
      %45 = sbr.rel (0) target = $region13
    $region12: #{tpu_custom_call.1} parent=1 // pred_region
      %s47 = ssub.s32 128, 128
      %48 = vsyncadd [#allocation4], %s47
      %s49 = sshll.u32 [#allocation3], 4
      %s50 = int_to_ptr.vmem [resolvable:$true] %s49
      %55 = dma.hbm_to_vmem [thread:$0]  %s2, 128, %s50, [#allocation4], 64, 64, 4
    $region13: #{tpu_custom_call.1} parent=1 // pred_fallthru
      _
    // Predicated region
    $region14: #{tpu_custom_call.1} parent=1 // pred_check
      _
    $region15: #{tpu_custom_call.1} parent=1 // pred_check_branch
      %57 = sbr.rel (0) target = $region17
    $region16: #{tpu_custom_call.1} parent=1 // pred_region
      _
    $region17: #{tpu_custom_call.1} parent=1 // pred_fallthru
      _
    // Predicated region
    $region18: #{tpu_custom_call.1} parent=1 // pred_check
      _
    $region19: #{tpu_custom_call.1} parent=1 // pred_check_branch
      %59 = sbr.rel (0) target = $region21
    $region20: #{tpu_custom_call.1} parent=1 // pred_region
      %s61 = ssub.s32 128, 128
      %62 = vsyncadd [#allocation7], %s61
      %s63 = sshll.u32 [#allocation6], 4
      %s64 = int_to_ptr.vmem [resolvable:$true] %s63
      %69 = dma.hbm_to_vmem [thread:$0]  %s4, 128, %s64, [#allocation7], 64, 64, 4
    $region21: #{tpu_custom_call.1} parent=1 // pred_fallthru
      _
    // Predicated region
    $region22: #{tpu_custom_call.1} parent=1 // pred_check
      _
    $region23: #{tpu_custom_call.1} parent=1 // pred_check_branch
      %71 = sbr.rel (0) target = $region25
    $region24: #{tpu_custom_call.1} parent=1 // pred_region
      _
    $region25: #{tpu_custom_call.1} parent=1 // pred_fallthru
      _
    // Predicated region
    $region26: #{tpu_custom_call.1} parent=1 // pred_check
      _
    $region27: #{tpu_custom_call.1} parent=1 // pred_check_branch
      %73 = sbr.rel (0) target = $region29
    $region28: #{tpu_custom_call.1} parent=1 // pred_region
      %s75 = ssub.s32 128, 128
      %76 = vsyncadd [#allocation7], %s75
      %s77 = sshll.u32 [#allocation8], 4
      %s78 = int_to_ptr.vmem [resolvable:$true] %s77
      %83 = dma.hbm_to_vmem [thread:$0]  %s6, 128, %s78, [#allocation7], 64, 64, 4
    $region29: #{tpu_custom_call.1} parent=1 // pred_fallthru
      _
    // Predicated region
    $region30: #{tpu_custom_call.1} parent=1 // pred_check
      _
    $region31: #{tpu_custom_call.1} parent=1 // pred_check_branch
      %85 = sbr.rel (0) target = $region33
    $region32: #{tpu_custom_call.1} parent=1 // pred_region
      %s87 = ssub.s32 16, 16
      %88 = vsyncadd [#allocation10], %s87
      %s90 = sshll.u32 [#allocation9], 4
      %s91 = int_to_ptr.vmem [resolvable:$true] %s90
      %93 = dma.hbm_to_vmem [thread:$0]  %s7, 16, %s91, [#allocation10]
    $region33: #{tpu_custom_call.1} parent=1 // pred_fallthru
      _
    // Predicated region
    $region34: #{tpu_custom_call.1} parent=1 // pred_check
      _
    $region35: #{tpu_custom_call.1} parent=1 // pred_check_branch
      %95 = sbr.rel (0) target = $region37
    $region36: #{tpu_custom_call.1} parent=1 // pred_region
      %s97 = ssub.s32 2048, 2048
      %98 = vsyncadd [#allocation10], %s97
      %s99 = sshll.u32 [#allocation11], 4
      %s100 = int_to_ptr.vmem [resolvable:$true] %s99
      %105 = dma.hbm_to_vmem [thread:$0]  %s8, 2048, %s100, [#allocation10], 64, 64, 4
    $region37: #{tpu_custom_call.1} parent=1 // pred_fallthru
      _
    // Predicated region
    $region38: #{tpu_custom_call.1} parent=1 // pred_check
      _
    $region39: #{tpu_custom_call.1} parent=1 // pred_check_branch
      %107 = sbr.rel (0) target = $region41
    $region40: #{tpu_custom_call.1} parent=1 // pred_region
      %s109 = ssub.s32 2048, 2048
      %110 = vsyncadd [#allocation13], %s109
      %s111 = sshll.u32 [#allocation12], 4
      %s112 = int_to_ptr.vmem [resolvable:$true] %s111
      %117 = dma.hbm_to_vmem [thread:$0]  %s9, 2048, %s112, [#allocation13], 64, 64, 4
    $region41: #{tpu_custom_call.1} parent=1 // pred_fallthru
      _
    // Predicated region
    $region42: #{tpu_custom_call.1} parent=1 // pred_check
      _
    $region43: #{tpu_custom_call.1} parent=1 // pred_check_branch
      %119 = sbr.rel (0) target = $region45
    $region44: #{tpu_custom_call.1} parent=1 // pred_region
      _
    $region45: #{tpu_custom_call.1} parent=1 // pred_fallthru
      _
    // Predicated region
    $region46: #{tpu_custom_call.1} parent=1 // pred_check
      _
    $region47: #{tpu_custom_call.1} parent=1 // pred_check_branch
      %121 = sbr.rel (0) target = $region49
    $region48: #{tpu_custom_call.1} parent=1 // pred_region
      _
    $region49: #{tpu_custom_call.1} parent=1 // pred_fallthru
      _
    // Predicated region
    $region50: #{tpu_custom_call.1} parent=1 // pred_check
      _
    $region51: #{tpu_custom_call.1} parent=1 // pred_check_branch
      %123 = sbr.rel (0) target = $region53
    $region52: #{tpu_custom_call.1} parent=1 // pred_region
      %s125 = ssub.s32 2048, 2048
      %126 = vsyncadd [#allocation13], %s125
      %s127 = sshll.u32 [#allocation14], 4
      %s128 = int_to_ptr.vmem [resolvable:$true] %s127
      %133 = dma.hbm_to_vmem [thread:$0]  %s12, 2048, %s128, [#allocation13], 64, 64, 4
    $region53: #{tpu_custom_call.1} parent=1 // pred_fallthru
      _
    // Predicated region
    $region54: #{tpu_custom_call.1} parent=1 // pred_check
      _
    $region55: #{tpu_custom_call.1} parent=1 // pred_check_branch
      %135 = sbr.rel (0) target = $region57
    $region56: #{tpu_custom_call.1} parent=1 // pred_region
      _
    $region57: #{tpu_custom_call.1} parent=1 // pred_fallthru
      _
    // Predicated region
    $region58: #{tpu_custom_call.1} parent=1 // pred_check
      _
    $region59: #{tpu_custom_call.1} parent=1 // pred_check_branch
      %137 = sbr.rel (0) target = $region61
    $region60: #{tpu_custom_call.1} parent=1 // pred_region
      %s139 = ssub.s32 2048, 2048
      %140 = vsyncadd [#allocation16], %s139
      %s141 = sshll.u32 [#allocation15], 4
      %s142 = int_to_ptr.vmem [resolvable:$true] %s141
      %147 = dma.hbm_to_vmem [thread:$0]  %s14, 2048, %s142, [#allocation16], 64, 64, 4
    $region61: #{tpu_custom_call.1} parent=1 // pred_fallthru
      _
    // Predicated region
    $region62: #{tpu_custom_call.1} parent=1 // pred_check
      _
    $region63: #{tpu_custom_call.1} parent=1 // pred_check_branch
      %149 = sbr.rel (0) target = $region65
    $region64: #{tpu_custom_call.1} parent=1 // pred_region
      %s151 = ssub.s32 2048, 2048
      %152 = vsyncadd [#allocation16], %s151
      %s153 = sshll.u32 [#allocation17], 4
      %s154 = int_to_ptr.vmem [resolvable:$true] %s153
      %159 = dma.hbm_to_vmem [thread:$0]  %s15, 2048, %s154, [#allocation16], 64, 64, 4
    $region65: #{tpu_custom_call.1} parent=1 // pred_fallthru
      _
    // Predicated region
    $region66: #{tpu_custom_call.1} parent=1 // pred_check
      _
    $region67: #{tpu_custom_call.1} parent=1 // pred_check_branch
      %161 = sbr.rel (0) target = $region69
    $region68: #{tpu_custom_call.1} parent=1 // pred_region
      _
    $region69: #{tpu_custom_call.1} parent=1 // pred_fallthru
      _
    // Predicated region
    $region70: #{tpu_custom_call.1} parent=1 // pred_check
      _
    $region71: #{tpu_custom_call.1} parent=1 // pred_check_branch
      %163 = sbr.rel (0) target = $region73
    $region72: #{tpu_custom_call.1} parent=1 // pred_region
      %s165 = ssub.s32 2048, 2048
      %166 = vsyncadd [#allocation19], %s165
      %s167 = sshll.u32 [#allocation18], 4
      %s168 = int_to_ptr.vmem [resolvable:$true] %s167
      %173 = dma.hbm_to_vmem [thread:$0]  %s17, 2048, %s168, [#allocation19], 64, 64, 4
    $region73: #{tpu_custom_call.1} parent=1 // pred_fallthru
      _
    // Predicated region
    $region74: #{tpu_custom_call.1} parent=1 // pred_check
      _
    $region75: #{tpu_custom_call.1} parent=1 // pred_check_branch
      %175 = sbr.rel (0) target = $region77
    $region76: #{tpu_custom_call.1} parent=1 // pred_region
      _
    $region77: #{tpu_custom_call.1} parent=1 // pred_fallthru
      _
    // Predicated region
    $region78: #{tpu_custom_call.1} parent=1 // pred_check
      _
    $region79: #{tpu_custom_call.1} parent=1 // pred_check_branch
      %177 = sbr.rel (0) target = $region81
    $region80: #{tpu_custom_call.1} parent=1 // pred_region
      %s179 = ssub.s32 1024, 1024
      %180 = vsyncadd [#allocation19], %s179
      %s181 = sshll.u32 [#allocation20], 4
      %s182 = int_to_ptr.vmem [resolvable:$true] %s181
      %187 = dma.hbm_to_vmem [thread:$0]  %s19, 1024, %s182, [#allocation19], 64, 64, 4
    $region81: #{tpu_custom_call.1} parent=1 // pred_fallthru
      _
    // Predicated region
    $region82: #{tpu_custom_call.1} parent=1 // pred_check
      _
    $region83: #{tpu_custom_call.1} parent=1 // pred_check_branch
      %189 = sbr.rel (0) target = $region85
    $region84: #{tpu_custom_call.1} parent=1 // pred_region
      _
    $region85: #{tpu_custom_call.1} parent=1 // pred_fallthru
      _
    // Predicated region
    $region86: #{tpu_custom_call.1} parent=1 // pred_check
      _
    $region87: #{tpu_custom_call.1} parent=1 // pred_check_branch
      %191 = sbr.rel (0) target = $region89
    $region88: #{tpu_custom_call.1} parent=1 // pred_region
      %s193 = ssub.s32 1024, 1024
      %194 = vsyncadd [#allocation22], %s193
      %s195 = sshll.u32 [#allocation21], 4
      %s196 = int_to_ptr.vmem [resolvable:$true] %s195
      %201 = dma.hbm_to_vmem [thread:$0]  %s21, 1024, %s196, [#allocation22], 64, 64, 4
    $region89: #{tpu_custom_call.1} parent=1 // pred_fallthru
      _
    // Predicated region
    $region90: #{tpu_custom_call.1} parent=1 // pred_check
      _
    $region91: #{tpu_custom_call.1} parent=1 // pred_check_branch
      %203 = sbr.rel (0) target = $region93
    $region92: #{tpu_custom_call.1} parent=1 // pred_region
      _
    $region93: #{tpu_custom_call.1} parent=1 // pred_fallthru
      _
    // Predicated region
    $region94: #{tpu_custom_call.1} parent=1 // pred_check
      _
    $region95: #{tpu_custom_call.1} parent=1 // pred_check_branch
      %205 = sbr.rel (0) target = $region97
    $region96: #{tpu_custom_call.1} parent=1 // pred_region
      _
    $region97: #{tpu_custom_call.1} parent=1 // pred_fallthru
      _
    // Predicated region
    $region98: #{tpu_custom_call.1} parent=1 // pred_check
      _
    $region99: #{tpu_custom_call.1} parent=1 // pred_check_branch
      %207 = sbr.rel (0) target = $region101
    $region100: #{tpu_custom_call.1} parent=1 // pred_region
      _
    $region101: #{tpu_custom_call.1} parent=1 // pred_fallthru
      _
    // Predicated region
    $region102: #{tpu_custom_call.1} parent=1 // pred_check
      _
    $region103: #{tpu_custom_call.1} parent=1 // pred_check_branch
      %209 = sbr.rel (0) target = $region105
    $region104: #{tpu_custom_call.1} parent=1 // pred_region
      %210 = dma.done [#allocation4], 128
    $region105: #{tpu_custom_call.1} parent=1 // pred_fallthru
      _
    // Predicated region
    $region106: #{tpu_custom_call.1} parent=1 // pred_check
      _
    $region107: #{tpu_custom_call.1} parent=1 // pred_check_branch
      %212 = sbr.rel (0) target = $region109
    $region108: #{tpu_custom_call.1} parent=1 // pred_region
      %213 = dma.done [#allocation7], 128
    $region109: #{tpu_custom_call.1} parent=1 // pred_fallthru
      _
    // Predicated region
    $region110: #{tpu_custom_call.1} parent=1 // pred_check
      _
    $region111: #{tpu_custom_call.1} parent=1 // pred_check_branch
      %215 = sbr.rel (0) target = $region113
    $region112: #{tpu_custom_call.1} parent=1 // pred_region
      %216 = dma.done [#allocation7], 128
    $region113: #{tpu_custom_call.1} parent=1 // pred_fallthru
      _
    // Predicated region
    $region114: #{tpu_custom_call.1} parent=1 // pred_check
      _
    $region115: #{tpu_custom_call.1} parent=1 // pred_check_branch
      %218 = sbr.rel (0) target = $region117
    $region116: #{tpu_custom_call.1} parent=1 // pred_region
      %219 = dma.done [#allocation10], 16
    $region117: #{tpu_custom_call.1} parent=1 // pred_fallthru
      _
    // Predicated region
    $region118: #{tpu_custom_call.1} parent=1 // pred_check
      _
    $region119: #{tpu_custom_call.1} parent=1 // pred_check_branch
      %221 = sbr.rel (0) target = $region121
    $region120: #{tpu_custom_call.1} parent=1 // pred_region
      %222 = dma.done [#allocation10], 2048
    $region121: #{tpu_custom_call.1} parent=1 // pred_fallthru
      _
    // Predicated region
    $region122: #{tpu_custom_call.1} parent=1 // pred_check
      _
    $region123: #{tpu_custom_call.1} parent=1 // pred_check_branch
      %224 = sbr.rel (0) target = $region125
    $region124: #{tpu_custom_call.1} parent=1 // pred_region
      %225 = dma.done [#allocation13], 2048
    $region125: #{tpu_custom_call.1} parent=1 // pred_fallthru
      _
    // Predicated region
    $region126: #{tpu_custom_call.1} parent=1 // pred_check
      _
    $region127: #{tpu_custom_call.1} parent=1 // pred_check_branch
      %227 = sbr.rel (0) target = $region129
    $region128: #{tpu_custom_call.1} parent=1 // pred_region
      %228 = dma.done [#allocation13], 2048
    $region129: #{tpu_custom_call.1} parent=1 // pred_fallthru
      _
    // Predicated region
    $region130: #{tpu_custom_call.1} parent=1 // pred_check
      _
    $region131: #{tpu_custom_call.1} parent=1 // pred_check_branch
      %230 = sbr.rel (0) target = $region133
    $region132: #{tpu_custom_call.1} parent=1 // pred_region
      %231 = dma.done [#allocation16], 2048
    $region133: #{tpu_custom_call.1} parent=1 // pred_fallthru
      _
    // Predicated region
    $region134: #{tpu_custom_call.1} parent=1 // pred_check
      _
    $region135: #{tpu_custom_call.1} parent=1 // pred_check_branch
      %233 = sbr.rel (0) target = $region137
    $region136: #{tpu_custom_call.1} parent=1 // pred_region
      %234 = dma.done [#allocation16], 2048
    $region137: #{tpu_custom_call.1} parent=1 // pred_fallthru
      _
    // Predicated region
    $region138: #{tpu_custom_call.1} parent=1 // pred_check
      _
    $region139: #{tpu_custom_call.1} parent=1 // pred_check_branch
      %236 = sbr.rel (0) target = $region141
    $region140: #{tpu_custom_call.1} parent=1 // pred_region
      %237 = dma.done [#allocation19], 2048
    $region141: #{tpu_custom_call.1} parent=1 // pred_fallthru
      _
    // Predicated region
    $region142: #{tpu_custom_call.1} parent=1 // pred_check
      _
    $region143: #{tpu_custom_call.1} parent=1 // pred_check_branch
      %239 = sbr.rel (0) target = $region145
    $region144: #{tpu_custom_call.1} parent=1 // pred_region
      %240 = dma.done [#allocation19], 1024
    $region145: #{tpu_custom_call.1} parent=1 // pred_fallthru
      _
    // Predicated region
    $region146: #{tpu_custom_call.1} parent=1 // pred_check
      _
    $region147: #{tpu_custom_call.1} parent=1 // pred_check_branch
      %242 = sbr.rel (0) target = $region149
    $region148: #{tpu_custom_call.1} parent=1 // pred_region
      %243 = dma.done [#allocation22], 1024
    $region149: #{tpu_custom_call.1} parent=1 // pred_fallthru
      _
    %v245 = vld [vmem:[#allocation3] sm:$0xf]
    %v246 = vld [vmem:[#allocation3 + $0x4] sm:$0xf]
    %v247 = vld [vmem:[#allocation6] sm:$0xf]
    %v248 = vld [vmem:[#allocation6 + $0x4] sm:$0xf]
    %v249 = vld [vmem:[%s5] sm:$0x1]
    %v251 = vlaneseq
    %v252 = vshrl.u32 %v251, 7
    %v253 = vsub.s32 0, %v252
    %v254 = vrot.slane %v249, %v253
    %v258 = vunpack.c.l.b16 %v245
    %v259 = vunpack.c.l.b16 %v246
    %v260 = vpack.c.b16 %v259, %v258
    %v263 = vunpack.c.l.b16 %v247
    %v264 = vunpack.c.l.b16 %v248
    %v265 = vpack.c.b16 %v264, %v263
    %vm267 = vcmask 130048
    %v269 = vsel %vm267, %v260, 0
    %271 = vmatprep.subr.bf16.mxu0 0
    %272 = vmatpush1.bf16.msra.mxu0 %v265
    %273 = vmatprep.subr.bf16.mxu0 0
    %274 = vmatpush1.bf16.msra.mxu0 0
    %275 = vmatprep.subr.bf16.mxu0 0
    %276 = vmatpush1.bf16.msra.mxu0 0
    %277 = vmatprep.subr.bf16.mxu0 0
    %278 = vmatpush1.bf16.msra.mxu0 0
    %279 = vmatprep.subr.bf16.mxu0 0
    %280 = vmatpush1.bf16.msra.mxu0 0
    %281 = vmatprep.subr.bf16.mxu0 0
    %282 = vmatpush1.bf16.msra.mxu0 0
    %283 = vmatprep.subr.bf16.mxu0 0
    %284 = vmatpush1.bf16.msra.mxu0 0
    %285 = vmatprep.subr.bf16.mxu0 0
    %286 = vmatpush1.bf16.msra.mxu0 0
    %287 = vmatprep.subr.bf16.mxu0 0
    %288 = vmatpush1.bf16.msra.mxu0 0
    %289 = vmatprep.subr.bf16.mxu0 0
    %290 = vmatpush1.bf16.msra.mxu0 0
    %291 = vmatprep.subr.bf16.mxu0 0
    %292 = vmatpush1.bf16.msra.mxu0 0
    %293 = vmatprep.subr.bf16.mxu0 0
    %294 = vmatpush1.bf16.msra.mxu0 0
    %295 = vmatprep.subr.bf16.mxu0 0
    %296 = vmatpush1.bf16.msra.mxu0 0
    %297 = vmatprep.subr.bf16.mxu0 0
    %298 = vmatpush1.bf16.msra.mxu0 0
    %299 = vmatprep.subr.bf16.mxu0 0
    %300 = vmatpush1.bf16.msra.mxu0 0
    %301 = vmatprep.subr.bf16.mxu0 0
    %302 = vmatpush1.bf16.msra.mxu0 0
    %303 = vmatprep.mubr.bf16.mxu0 0
    %304 = vmatmul.mubr.bf16.gmra.mrb[0].mxu0 %v269
    %v305 = vpop.f32.mrb[0].mxu0
    %v306 = vadd.f32 %v254, %v305
    %v307 = vpop.f32.mrb[0].mxu0
    %v308 = vpop.f32.mrb[0].mxu0
    %v309 = vadd.f32 %v254, %v308
    %v310 = vpop.f32.mrb[0].mxu0
    %311 = vdwg.mxu0
    %v312 = vmax.f32 %v306, 0.0
    %v313 = vmax.f32 %v309, 0.0
    %v314 = vpack.c.bf16 %v313, %v312
    %v315 = vld [vmem:[%s3] sm:$0xf]
    %v316 = vld [vmem:[%s3 + $0x4] sm:$0xf]
    %v317 = vld [vmem:[%s3 + $0x8] sm:$0xf]
    %v318 = vld [vmem:[%s3 + $0xc] sm:$0xf]
    %v319 = vld [vmem:[#allocation8] sm:$0xf]
    %v320 = vld [vmem:[#allocation8 + $0x4] sm:$0xf]
    %v321 = vld [vmem:[#allocation9] sm:$0x1]
    %v323 = vlaneseq
    %v324 = vshrl.u32 %v323, 7
    %v325 = vsub.s32 0, %v324
    %v326 = vrot.slane %v321, %v325
    %v332 = vunpack.c.l.b16 %v315
    %v333 = vunpack.c.l.b16 %v316
    %v334 = vunpack.c.l.b16 %v317
    %v335 = vunpack.c.l.b16 %v318
    %v336 = vpack.c.b16 %v333, %v332
    %v337 = vpack.c.b16 %v335, %v334
    %v340 = vunpack.c.l.b16 %v319
    %v341 = vunpack.c.l.b16 %v320
    %v342 = vpack.c.b16 %v341, %v340
    %v345 = vsel %vm267, %v336, 0
    %v348 = vsel %vm267, %v337, 0
    %350 = vmatprep.subr.bf16.mxu0 0
    %351 = vmatpush1.bf16.msra.mxu0 %v342
    %352 = vmatprep.subr.bf16.mxu0 0
    %353 = vmatpush1.bf16.msra.mxu0 0
    %354 = vmatprep.subr.bf16.mxu0 0
    %355 = vmatpush1.bf16.msra.mxu0 0
    %356 = vmatprep.subr.bf16.mxu0 0
    %357 = vmatpush1.bf16.msra.mxu0 0
    %358 = vmatprep.subr.bf16.mxu0 0
    %359 = vmatpush1.bf16.msra.mxu0 0
    %360 = vmatprep.subr.bf16.mxu0 0
    %361 = vmatpush1.bf16.msra.mxu0 0
    %362 = vmatprep.subr.bf16.mxu0 0
    %363 = vmatpush1.bf16.msra.mxu0 0
    %364 = vmatprep.subr.bf16.mxu0 0
    %365 = vmatpush1.bf16.msra.mxu0 0
    %366 = vmatprep.subr.bf16.mxu0 0
    %367 = vmatpush1.bf16.msra.mxu0 0
    %368 = vmatprep.subr.bf16.mxu0 0
    %369 = vmatpush1.bf16.msra.mxu0 0
    %370 = vmatprep.subr.bf16.mxu0 0
    %371 = vmatpush1.bf16.msra.mxu0 0
    %372 = vmatprep.subr.bf16.mxu0 0
    %373 = vmatpush1.bf16.msra.mxu0 0
    %374 = vmatprep.subr.bf16.mxu0 0
    %375 = vmatpush1.bf16.msra.mxu0 0
    %376 = vmatprep.subr.bf16.mxu0 0
    %377 = vmatpush1.bf16.msra.mxu0 0
    %378 = vmatprep.subr.bf16.mxu0 0
    %379 = vmatpush1.bf16.msra.mxu0 0
    %380 = vmatprep.subr.bf16.mxu0 0
    %381 = vmatpush1.bf16.msra.mxu0 0
    %382 = vmatprep.mubr.bf16.mxu0 0
    %383 = vmatmul.mubr.bf16.gmra.mrb[0].mxu0 %v345
    %v384 = vpop.f32.mrb[0].mxu0
    %v385 = vadd.f32 %v326, %v384
    %v386 = vpop.f32.mrb[0].mxu0
    %v387 = vpop.f32.mrb[0].mxu0
    %v388 = vadd.f32 %v326, %v387
    %v389 = vpop.f32.mrb[0].mxu0
    %390 = vmatprep.mubr.bf16.mxu0 0
    %391 = vmatmul.mubr.bf16.gmra.mrb[0].mxu0 %v348
    %v392 = vpop.f32.mrb[0].mxu0
    %v393 = vadd.f32 %v326, %v392
    %v394 = vpop.f32.mrb[0].mxu0
    %v395 = vpop.f32.mrb[0].mxu0
    %v396 = vadd.f32 %v326, %v395
    %v397 = vpop.f32.mrb[0].mxu0
    %398 = vdwg.mxu0
    %v399 = vmax.f32 %v385, 0.0
    %v400 = vmax.f32 %v388, 0.0
    %v401 = vmax.f32 %v393, 0.0
    %v402 = vmax.f32 %v396, 0.0
    %v403 = vpack.c.bf16 %v400, %v399
    %v404 = vpack.c.bf16 %v402, %v401
    %v405 = vlaneseq
    %v406 = vand.u32 %v405, 127
    %v407 = vld [vmem:[%s0] sm:$0xff]
    %v408 = vld [vmem:[%s0 + $0x8] sm:$0xff]
    %v409 = vld [vmem:[%s0 + $0x10] sm:$0xff]
    %v410 = vld [vmem:[%s0 + $0x18] sm:$0xff]
    %411 = vset.pattern.permute.xlu0 0
    %412 = vperm.xlu0 %411, %v407
    %v413 = vpop.permute.xlu0 %412
    %414 = vset.pattern.permute.xlu0 0
    %415 = vperm.xlu0 %414, %v408
    %v416 = vpop.permute.xlu0 %415
    %417 = vset.pattern.permute.xlu0 0
    %418 = vperm.xlu0 %417, %v409
    %v419 = vpop.permute.xlu0 %418
    %420 = vset.pattern.permute.xlu0 0
    %421 = vperm.xlu0 %420, %v410
    %v422 = vpop.permute.xlu0 %421
    %vm423 = vcmp.eq.s32.totalorder %v413, %v406
    %vm424 = vcmp.eq.s32.totalorder %v416, %v406
    %vm425 = vcmp.eq.s32.totalorder %v419, %v406
    %vm426 = vcmp.eq.s32.totalorder %v422, %v406
    %v427 = vsel %vm423, 1, 0
    %v428 = vsel %vm424, 1, 0
    %v429 = vsel %vm425, 1, 0
    %v430 = vsel %vm426, 1, 0
    %v431 = vcvt.s32.f32 %v427
    %v432 = vcvt.s32.f32 %v428
    %v433 = vcvt.s32.f32 %v429
    %v434 = vcvt.s32.f32 %v430
    %v435 = vpack.c.bf16 %v432, %v431
    %v436 = vpack.c.bf16 %v434, %v433
    %v437 = vld [vmem:[%s1] sm:$0xff]
    %v438 = vld [vmem:[%s1 + $0x8] sm:$0xff]
    %v439 = vld [vmem:[%s1 + $0x10] sm:$0xff]
    %v440 = vld [vmem:[%s1 + $0x18] sm:$0xff]
    %441 = vset.pattern.permute.xlu0 0
    %442 = vperm.xlu0 %441, %v437
    %v443 = vpop.permute.xlu0 %442
    %444 = vset.pattern.permute.xlu0 0
    %445 = vperm.xlu0 %444, %v438
    %v446 = vpop.permute.xlu0 %445
    %447 = vset.pattern.permute.xlu0 0
    %448 = vperm.xlu0 %447, %v439
    %v449 = vpop.permute.xlu0 %448
    %450 = vset.pattern.permute.xlu0 0
    %451 = vperm.xlu0 %450, %v440
    %v452 = vpop.permute.xlu0 %451
    %vm453 = vcmp.eq.s32.totalorder %v443, %v406
    %vm454 = vcmp.eq.s32.totalorder %v446, %v406
    %vm455 = vcmp.eq.s32.totalorder %v449, %v406
    %vm456 = vcmp.eq.s32.totalorder %v452, %v406
    %v457 = vsel %vm453, 1, 0
    %v458 = vsel %vm454, 1, 0
    %v459 = vsel %vm455, 1, 0
    %v460 = vsel %vm456, 1, 0
    %v461 = vcvt.s32.f32 %v457
    %v462 = vcvt.s32.f32 %v458
    %v463 = vcvt.s32.f32 %v459
    %v464 = vcvt.s32.f32 %v460
    %v465 = vpack.c.bf16 %v462, %v461
    %v466 = vpack.c.bf16 %v464, %v463
    %v467 = vld [vmem:[#allocation12] sm:$0xf]
    %v468 = vld [vmem:[#allocation12 + $0x4] sm:$0xf]
    %v469 = vld [vmem:[#allocation12 + $0x8] sm:$0xf]
    %v470 = vld [vmem:[#allocation12 + $0xc] sm:$0xf]
    %v471 = vld [vmem:[#allocation12 + $0x10] sm:$0xf]
    %v472 = vld [vmem:[#allocation12 + $0x14] sm:$0xf]
    %v473 = vld [vmem:[#allocation12 + $0x18] sm:$0xf]
    %v474 = vld [vmem:[#allocation12 + $0x1c] sm:$0xf]
    %v475 = vld [vmem:[#allocation12 + $0x20] sm:$0xf]
    %v476 = vld [vmem:[#allocation12 + $0x24] sm:$0xf]
    %v477 = vld [vmem:[#allocation12 + $0x28] sm:$0xf]
    %v478 = vld [vmem:[#allocation12 + $0x2c] sm:$0xf]
    %v479 = vld [vmem:[#allocation12 + $0x30] sm:$0xf]
    %v480 = vld [vmem:[#allocation12 + $0x34] sm:$0xf]
    %v481 = vld [vmem:[#allocation12 + $0x38] sm:$0xf]
    %v482 = vld [vmem:[#allocation12 + $0x3c] sm:$0xf]
    %v499 = vunpack.c.l.b16 %v467
    %v500 = vunpack.c.l.b16 %v468
    %v501 = vunpack.c.l.b16 %v469
    %v502 = vunpack.c.l.b16 %v470
    %v503 = vunpack.c.l.b16 %v471
    %v504 = vunpack.c.l.b16 %v472
    %v505 = vunpack.c.l.b16 %v473
    %v506 = vunpack.c.l.b16 %v474
    %v507 = vunpack.c.l.b16 %v475
    %v508 = vunpack.c.l.b16 %v476
    %v509 = vunpack.c.l.b16 %v477
    %v510 = vunpack.c.l.b16 %v478
    %v511 = vunpack.c.l.b16 %v479
    %v512 = vunpack.c.l.b16 %v480
    %v513 = vunpack.c.l.b16 %v481
    %v514 = vunpack.c.l.b16 %v482
    %v515 = vpack.c.b16 %v500, %v499
    %v516 = vpack.c.b16 %v502, %v501
    %v517 = vpack.c.b16 %v504, %v503
    %v518 = vpack.c.b16 %v506, %v505
    %v519 = vpack.c.b16 %v508, %v507
    %v520 = vpack.c.b16 %v510, %v509
    %v521 = vpack.c.b16 %v512, %v511
    %v522 = vpack.c.b16 %v514, %v513
    %531 = vmatprep.subr.bf16.mxu0 0
    %532 = vmatpush1.bf16.msra.mxu0 %v515
    %533 = vmatprep.subr.bf16.mxu0 0
    %534 = vmatpush1.bf16.msra.mxu0 %v516
    %535 = vmatprep.subr.bf16.mxu0 0
    %536 = vmatpush1.bf16.msra.mxu0 %v517
    %537 = vmatprep.subr.bf16.mxu0 0
    %538 = vmatpush1.bf16.msra.mxu0 %v518
    %539 = vmatprep.subr.bf16.mxu0 0
    %540 = vmatpush1.bf16.msra.mxu0 %v519
    %541 = vmatprep.subr.bf16.mxu0 0
    %542 = vmatpush1.bf16.msra.mxu0 %v520
    %543 = vmatprep.subr.bf16.mxu0 0
    %544 = vmatpush1.bf16.msra.mxu0 %v521
    %545 = vmatprep.subr.bf16.mxu0 0
    %546 = vmatpush1.bf16.msra.mxu0 %v522
    %547 = vmatprep.subr.bf16.mxu0 0
    %548 = vmatpush1.bf16.msra.mxu0 0
    %549 = vmatprep.subr.bf16.mxu0 0
    %550 = vmatpush1.bf16.msra.mxu0 0
    %551 = vmatprep.subr.bf16.mxu0 0
    %552 = vmatpush1.bf16.msra.mxu0 0
    %553 = vmatprep.subr.bf16.mxu0 0
    %554 = vmatpush1.bf16.msra.mxu0 0
    %555 = vmatprep.subr.bf16.mxu0 0
    %556 = vmatpush1.bf16.msra.mxu0 0
    %557 = vmatprep.subr.bf16.mxu0 0
    %558 = vmatpush1.bf16.msra.mxu0 0
    %559 = vmatprep.subr.bf16.mxu0 0
    %560 = vmatpush1.bf16.msra.mxu0 0
    %561 = vmatprep.subr.bf16.mxu0 0
    %562 = vmatpush1.bf16.msra.mxu0 0
    %563 = vmatprep.mubr.bf16.mxu0 0
    %564 = vmatmul.mubr.bf16.gmra.mrb[0].mxu0 %v314
    %v565 = vpop.f32.mrb[0].mxu0
    %v566 = vadd.f32 0.0, %v565
    %v567 = vpop.f32.mrb[0].mxu0
    %v568 = vpop.f32.mrb[0].mxu0
    %v569 = vadd.f32 0.0, %v568
    %v570 = vpop.f32.mrb[0].mxu0
    %571 = vdwg.mxu0
    %v572 = vpack.c.bf16 %v569, %v566
    %v573 = vld [vmem:[%s10] sm:$0xf]
    %v574 = vld [vmem:[%s10 + $0x4] sm:$0xf]
    %v575 = vld [vmem:[%s10 + $0x8] sm:$0xf]
    %v576 = vld [vmem:[%s10 + $0xc] sm:$0xf]
    %v577 = vld [vmem:[%s10 + $0x10] sm:$0xf]
    %v578 = vld [vmem:[%s10 + $0x14] sm:$0xf]
    %v579 = vld [vmem:[%s10 + $0x18] sm:$0xf]
    %v580 = vld [vmem:[%s10 + $0x1c] sm:$0xf]
    %v581 = vld [vmem:[%s10 + $0x20] sm:$0xf]
    %v582 = vld [vmem:[%s10 + $0x24] sm:$0xf]
    %v583 = vld [vmem:[%s10 + $0x28] sm:$0xf]
    %v584 = vld [vmem:[%s10 + $0x2c] sm:$0xf]
    %v585 = vld [vmem:[%s10 + $0x30] sm:$0xf]
    %v586 = vld [vmem:[%s10 + $0x34] sm:$0xf]
    %v587 = vld [vmem:[%s10 + $0x38] sm:$0xf]
    %v588 = vld [vmem:[%s10 + $0x3c] sm:$0xf]
    %v605 = vunpack.c.l.b16 %v573
    %v606 = vunpack.c.l.b16 %v574
    %v607 = vunpack.c.l.b16 %v575
    %v608 = vunpack.c.l.b16 %v576
    %v609 = vunpack.c.l.b16 %v577
    %v610 = vunpack.c.l.b16 %v578
    %v611 = vunpack.c.l.b16 %v579
    %v612 = vunpack.c.l.b16 %v580
    %v613 = vunpack.c.l.b16 %v581
    %v614 = vunpack.c.l.b16 %v582
    %v615 = vunpack.c.l.b16 %v583
    %v616 = vunpack.c.l.b16 %v584
    %v617 = vunpack.c.l.b16 %v585
    %v618 = vunpack.c.l.b16 %v586
    %v619 = vunpack.c.l.b16 %v587
    %v620 = vunpack.c.l.b16 %v588
    %v621 = vpack.c.b16 %v606, %v605
    %v622 = vpack.c.b16 %v608, %v607
    %v623 = vpack.c.b16 %v610, %v609
    %v624 = vpack.c.b16 %v612, %v611
    %v625 = vpack.c.b16 %v614, %v613
    %v626 = vpack.c.b16 %v616, %v615
    %v627 = vpack.c.b16 %v618, %v617
    %v628 = vpack.c.b16 %v620, %v619
    %637 = vmatprep.subr.bf16.mxu0 0
    %638 = vmatpush1.bf16.msra.mxu0 %v621
    %639 = vmatprep.subr.bf16.mxu0 0
    %640 = vmatpush1.bf16.msra.mxu0 %v622
    %641 = vmatprep.subr.bf16.mxu0 0
    %642 = vmatpush1.bf16.msra.mxu0 %v623
    %643 = vmatprep.subr.bf16.mxu0 0
    %644 = vmatpush1.bf16.msra.mxu0 %v624
    %645 = vmatprep.subr.bf16.mxu0 0
    %646 = vmatpush1.bf16.msra.mxu0 %v625
    %647 = vmatprep.subr.bf16.mxu0 0
    %648 = vmatpush1.bf16.msra.mxu0 %v626
    %649 = vmatprep.subr.bf16.mxu0 0
    %650 = vmatpush1.bf16.msra.mxu0 %v627
    %651 = vmatprep.subr.bf16.mxu0 0
    %652 = vmatpush1.bf16.msra.mxu0 %v628
    %653 = vmatprep.subr.bf16.mxu0 0
    %654 = vmatpush1.bf16.msra.mxu0 0
    %655 = vmatprep.subr.bf16.mxu0 0
    %656 = vmatpush1.bf16.msra.mxu0 0
    %657 = vmatprep.subr.bf16.mxu0 0
    %658 = vmatpush1.bf16.msra.mxu0 0
    %659 = vmatprep.subr.bf16.mxu0 0
    %660 = vmatpush1.bf16.msra.mxu0 0
    %661 = vmatprep.subr.bf16.mxu0 0
    %662 = vmatpush1.bf16.msra.mxu0 0
    %663 = vmatprep.subr.bf16.mxu0 0
    %664 = vmatpush1.bf16.msra.mxu0 0
    %665 = vmatprep.subr.bf16.mxu0 0
    %666 = vmatpush1.bf16.msra.mxu0 0
    %667 = vmatprep.subr.bf16.mxu0 0
    %668 = vmatpush1.bf16.msra.mxu0 0
    %669 = vmatprep.mubr.bf16.mxu0 0
    %670 = vmatmul.mubr.bf16.gmra.mrb[0].mxu0 %v314
    %v671 = vpop.f32.mrb[0].mxu0
    %v672 = vadd.f32 0.0, %v671
    %v673 = vpop.f32.mrb[0].mxu0
    %v674 = vpop.f32.mrb[0].mxu0
    %v675 = vadd.f32 0.0, %v674
    %v676 = vpop.f32.mrb[0].mxu0
    %677 = vdwg.mxu0
    %v678 = vpack.c.bf16 %v675, %v672
    %v679 = vld [vmem:[#allocation11] sm:$0xf]
    %v680 = vld [vmem:[#allocation11 + $0x4] sm:$0xf]
    %v681 = vld [vmem:[#allocation11 + $0x8] sm:$0xf]
    %v682 = vld [vmem:[#allocation11 + $0xc] sm:$0xf]
    %v683 = vld [vmem:[#allocation11 + $0x10] sm:$0xf]
    %v684 = vld [vmem:[#allocation11 + $0x14] sm:$0xf]
    %v685 = vld [vmem:[#allocation11 + $0x18] sm:$0xf]
    %v686 = vld [vmem:[#allocation11 + $0x1c] sm:$0xf]
    %v687 = vld [vmem:[#allocation11 + $0x20] sm:$0xf]
    %v688 = vld [vmem:[#allocation11 + $0x24] sm:$0xf]
    %v689 = vld [vmem:[#allocation11 + $0x28] sm:$0xf]
    %v690 = vld [vmem:[#allocation11 + $0x2c] sm:$0xf]
    %v691 = vld [vmem:[#allocation11 + $0x30] sm:$0xf]
    %v692 = vld [vmem:[#allocation11 + $0x34] sm:$0xf]
    %v693 = vld [vmem:[#allocation11 + $0x38] sm:$0xf]
    %v694 = vld [vmem:[#allocation11 + $0x3c] sm:$0xf]
    %v696 = vsel %vm267, %v435, 0
    %v699 = vsel %vm267, %v436, 0
    %701 = vmatprep.subr.bf16.mxu0 0
    %702 = vmatpush1.bf16.msra.mxu0 %v572
    %703 = vmatprep.subr.bf16.mxu0 0
    %704 = vmatpush1.bf16.msra.mxu0 0
    %705 = vmatprep.subr.bf16.mxu0 0
    %706 = vmatpush1.bf16.msra.mxu0 0
    %707 = vmatprep.subr.bf16.mxu0 0
    %708 = vmatpush1.bf16.msra.mxu0 0
    %709 = vmatprep.subr.bf16.mxu0 0
    %710 = vmatpush1.bf16.msra.mxu0 0
    %711 = vmatprep.subr.bf16.mxu0 0
    %712 = vmatpush1.bf16.msra.mxu0 0
    %713 = vmatprep.subr.bf16.mxu0 0
    %714 = vmatpush1.bf16.msra.mxu0 0
    %715 = vmatprep.subr.bf16.mxu0 0
    %716 = vmatpush1.bf16.msra.mxu0 0
    %717 = vmatprep.subr.bf16.mxu0 0
    %718 = vmatpush1.bf16.msra.mxu0 0
    %719 = vmatprep.subr.bf16.mxu0 0
    %720 = vmatpush1.bf16.msra.mxu0 0
    %721 = vmatprep.subr.bf16.mxu0 0
    %722 = vmatpush1.bf16.msra.mxu0 0
    %723 = vmatprep.subr.bf16.mxu0 0
    %724 = vmatpush1.bf16.msra.mxu0 0
    %725 = vmatprep.subr.bf16.mxu0 0
    %726 = vmatpush1.bf16.msra.mxu0 0
    %727 = vmatprep.subr.bf16.mxu0 0
    %728 = vmatpush1.bf16.msra.mxu0 0
    %729 = vmatprep.subr.bf16.mxu0 0
    %730 = vmatpush1.bf16.msra.mxu0 0
    %731 = vmatprep.subr.bf16.mxu0 0
    %732 = vmatpush1.bf16.msra.mxu0 0
    %733 = vmatprep.mubr.bf16.mxu0 0
    %734 = vmatmul.mubr.bf16.gmra.mrb[0].mxu0 %v696
    %v735 = vpop.f32.mrb[0].mxu0
    %v736 = vadd.f32 0.0, %v735
    %v737 = vpop.f32.mrb[0].mxu0
    %v738 = vpop.f32.mrb[0].mxu0
    %v739 = vadd.f32 0.0, %v738
    %v740 = vpop.f32.mrb[0].mxu0
    %741 = vmatprep.mubr.bf16.mxu0 0
    %742 = vmatmul.mubr.bf16.gmra.mrb[0].mxu0 %v699
    %v743 = vpop.f32.mrb[0].mxu0
    %v744 = vadd.f32 0.0, %v743
    %v745 = vpop.f32.mrb[0].mxu0
    %v746 = vpop.f32.mrb[0].mxu0
    %v747 = vadd.f32 0.0, %v746
    %v748 = vpop.f32.mrb[0].mxu0
    %749 = vdwg.mxu0
    %v766 = vunpack.c.l.b16 %v679
    %v767 = vunpack.c.l.b16 %v680
    %v768 = vunpack.c.l.b16 %v681
    %v769 = vunpack.c.l.b16 %v682
    %v770 = vunpack.c.l.b16 %v683
    %v771 = vunpack.c.l.b16 %v684
    %v772 = vunpack.c.l.b16 %v685
    %v773 = vunpack.c.l.b16 %v686
    %v774 = vunpack.c.l.b16 %v687
    %v775 = vunpack.c.l.b16 %v688
    %v776 = vunpack.c.l.b16 %v689
    %v777 = vunpack.c.l.b16 %v690
    %v778 = vunpack.c.l.b16 %v691
    %v779 = vunpack.c.l.b16 %v692
    %v780 = vunpack.c.l.b16 %v693
    %v781 = vunpack.c.l.b16 %v694
    %v782 = vpack.c.b16 %v767, %v766
    %v783 = vpack.c.b16 %v769, %v768
    %v784 = vpack.c.b16 %v771, %v770
    %v785 = vpack.c.b16 %v773, %v772
    %v786 = vpack.c.b16 %v775, %v774
    %v787 = vpack.c.b16 %v777, %v776
    %v788 = vpack.c.b16 %v779, %v778
    %v789 = vpack.c.b16 %v781, %v780
    %798 = vmatprep.subr.bf16.mxu0 0
    %799 = vmatpush1.bf16.msra.mxu0 %v782
    %800 = vmatprep.subr.bf16.mxu0 0
    %801 = vmatpush1.bf16.msra.mxu0 %v783
    %802 = vmatprep.subr.bf16.mxu0 0
    %803 = vmatpush1.bf16.msra.mxu0 %v784
    %804 = vmatprep.subr.bf16.mxu0 0
    %805 = vmatpush1.bf16.msra.mxu0 %v785
    %806 = vmatprep.subr.bf16.mxu0 0
    %807 = vmatpush1.bf16.msra.mxu0 %v786
    %808 = vmatprep.subr.bf16.mxu0 0
    %809 = vmatpush1.bf16.msra.mxu0 %v787
    %810 = vmatprep.subr.bf16.mxu0 0
    %811 = vmatpush1.bf16.msra.mxu0 %v788
    %812 = vmatprep.subr.bf16.mxu0 0
    %813 = vmatpush1.bf16.msra.mxu0 %v789
    %814 = vmatprep.subr.bf16.mxu0 0
    %815 = vmatpush1.bf16.msra.mxu0 0
    %816 = vmatprep.subr.bf16.mxu0 0
    %817 = vmatpush1.bf16.msra.mxu0 0
    %818 = vmatprep.subr.bf16.mxu0 0
    %819 = vmatpush1.bf16.msra.mxu0 0
    %820 = vmatprep.subr.bf16.mxu0 0
    %821 = vmatpush1.bf16.msra.mxu0 0
    %822 = vmatprep.subr.bf16.mxu0 0
    %823 = vmatpush1.bf16.msra.mxu0 0
    %824 = vmatprep.subr.bf16.mxu0 0
    %825 = vmatpush1.bf16.msra.mxu0 0
    %826 = vmatprep.subr.bf16.mxu0 0
    %827 = vmatpush1.bf16.msra.mxu0 0
    %828 = vmatprep.subr.bf16.mxu0 0
    %829 = vmatpush1.bf16.msra.mxu0 0
    %830 = vmatprep.mubr.bf16.mxu0 0
    %831 = vmatmul.mubr.bf16.gmra.mrb[0].mxu0 %v403
    %v832 = vpop.f32.mrb[0].mxu0
    %v833 = vadd.f32 %v736, %v832
    %v834 = vpop.f32.mrb[0].mxu0
    %v835 = vpop.f32.mrb[0].mxu0
    %v836 = vadd.f32 %v739, %v835
    %v837 = vpop.f32.mrb[0].mxu0
    %838 = vmatprep.mubr.bf16.mxu0 0
    %839 = vmatmul.mubr.bf16.gmra.mrb[0].mxu0 %v404
    %v840 = vpop.f32.mrb[0].mxu0
    %v841 = vadd.f32 %v744, %v840
    %v842 = vpop.f32.mrb[0].mxu0
    %v843 = vpop.f32.mrb[0].mxu0
    %v844 = vadd.f32 %v747, %v843
    %v845 = vpop.f32.mrb[0].mxu0
    %846 = vdwg.mxu0
    %v848 = vsel %vm267, %v465, 0
    %v851 = vsel %vm267, %v466, 0
    %853 = vmatprep.subr.bf16.mxu0 0
    %854 = vmatpush1.bf16.msra.mxu0 %v678
    %855 = vmatprep.subr.bf16.mxu0 0
    %856 = vmatpush1.bf16.msra.mxu0 0
    %857 = vmatprep.subr.bf16.mxu0 0
    %858 = vmatpush1.bf16.msra.mxu0 0
    %859 = vmatprep.subr.bf16.mxu0 0
    %860 = vmatpush1.bf16.msra.mxu0 0
    %861 = vmatprep.subr.bf16.mxu0 0
    %862 = vmatpush1.bf16.msra.mxu0 0
    %863 = vmatprep.subr.bf16.mxu0 0
    %864 = vmatpush1.bf16.msra.mxu0 0
    %865 = vmatprep.subr.bf16.mxu0 0
    %866 = vmatpush1.bf16.msra.mxu0 0
    %867 = vmatprep.subr.bf16.mxu0 0
    %868 = vmatpush1.bf16.msra.mxu0 0
    %869 = vmatprep.subr.bf16.mxu0 0
    %870 = vmatpush1.bf16.msra.mxu0 0
    %871 = vmatprep.subr.bf16.mxu0 0
    %872 = vmatpush1.bf16.msra.mxu0 0
    %873 = vmatprep.subr.bf16.mxu0 0
    %874 = vmatpush1.bf16.msra.mxu0 0
    %875 = vmatprep.subr.bf16.mxu0 0
    %876 = vmatpush1.bf16.msra.mxu0 0
    %877 = vmatprep.subr.bf16.mxu0 0
    %878 = vmatpush1.bf16.msra.mxu0 0
    %879 = vmatprep.subr.bf16.mxu0 0
    %880 = vmatpush1.bf16.msra.mxu0 0
    %881 = vmatprep.subr.bf16.mxu0 0
    %882 = vmatpush1.bf16.msra.mxu0 0
    %883 = vmatprep.subr.bf16.mxu0 0
    %884 = vmatpush1.bf16.msra.mxu0 0
    %885 = vmatprep.mubr.bf16.mxu0 0
    %886 = vmatmul.mubr.bf16.gmra.mrb[0].mxu0 %v848
    %v887 = vpop.f32.mrb[0].mxu0
    %v888 = vadd.f32 0.0, %v887
    %v889 = vpop.f32.mrb[0].mxu0
    %v890 = vpop.f32.mrb[0].mxu0
    %v891 = vadd.f32 0.0, %v890
    %v892 = vpop.f32.mrb[0].mxu0
    %893 = vmatprep.mubr.bf16.mxu0 0
    %894 = vmatmul.mubr.bf16.gmra.mrb[0].mxu0 %v851
    %v895 = vpop.f32.mrb[0].mxu0
    %v896 = vadd.f32 0.0, %v895
    %v897 = vpop.f32.mrb[0].mxu0
    %v898 = vpop.f32.mrb[0].mxu0
    %v899 = vadd.f32 0.0, %v898
    %v900 = vpop.f32.mrb[0].mxu0
    %901 = vdwg.mxu0
    %v902 = vadd.f32 %v833, %v888
    %v903 = vadd.f32 %v836, %v891
    %v904 = vadd.f32 %v841, %v896
    %v905 = vadd.f32 %v844, %v899
    %v906 = vld [vmem:[%s11] sm:$0x1]
    %v908 = vlaneseq
    %v909 = vshrl.u32 %v908, 7
    %v910 = vsub.s32 0, %v909
    %v911 = vrot.slane %v906, %v910
    %v913 = vadd.f32 %v902, %v911
    %v914 = vadd.f32 %v903, %v911
    %v915 = vadd.f32 %v904, %v911
    %v916 = vadd.f32 %v905, %v911
    %v917 = vmax.f32 %v913, 0.0
    %v918 = vmax.f32 %v914, 0.0
    %v919 = vmax.f32 %v915, 0.0
    %v920 = vmax.f32 %v916, 0.0
    %v921 = vpack.c.bf16 %v918, %v917
    %v922 = vpack.c.bf16 %v920, %v919
    %v923 = vld [vmem:[#allocation14] sm:$0xf]
    %v924 = vld [vmem:[#allocation14 + $0x4] sm:$0xf]
    %v925 = vld [vmem:[#allocation14 + $0x8] sm:$0xf]
    %v926 = vld [vmem:[#allocation14 + $0xc] sm:$0xf]
    %v927 = vld [vmem:[#allocation14 + $0x10] sm:$0xf]
    %v928 = vld [vmem:[#allocation14 + $0x14] sm:$0xf]
    %v929 = vld [vmem:[#allocation14 + $0x18] sm:$0xf]
    %v930 = vld [vmem:[#allocation14 + $0x1c] sm:$0xf]
    %v931 = vld [vmem:[#allocation14 + $0x20] sm:$0xf]
    %v932 = vld [vmem:[#allocation14 + $0x24] sm:$0xf]
    %v933 = vld [vmem:[#allocation14 + $0x28] sm:$0xf]
    %v934 = vld [vmem:[#allocation14 + $0x2c] sm:$0xf]
    %v935 = vld [vmem:[#allocation14 + $0x30] sm:$0xf]
    %v936 = vld [vmem:[#allocation14 + $0x34] sm:$0xf]
    %v937 = vld [vmem:[#allocation14 + $0x38] sm:$0xf]
    %v938 = vld [vmem:[#allocation14 + $0x3c] sm:$0xf]
    %v939 = vld [vmem:[%s13] sm:$0x1]
    %v941 = vlaneseq
    %v942 = vshrl.u32 %v941, 7
    %v943 = vsub.s32 0, %v942
    %v944 = vrot.slane %v939, %v943
    %v962 = vunpack.c.l.b16 %v923
    %v963 = vunpack.c.l.b16 %v924
    %v964 = vunpack.c.l.b16 %v925
    %v965 = vunpack.c.l.b16 %v926
    %v966 = vunpack.c.l.b16 %v927
    %v967 = vunpack.c.l.b16 %v928
    %v968 = vunpack.c.l.b16 %v929
    %v969 = vunpack.c.l.b16 %v930
    %v970 = vunpack.c.l.b16 %v931
    %v971 = vunpack.c.l.b16 %v932
    %v972 = vunpack.c.l.b16 %v933
    %v973 = vunpack.c.l.b16 %v934
    %v974 = vunpack.c.l.b16 %v935
    %v975 = vunpack.c.l.b16 %v936
    %v976 = vunpack.c.l.b16 %v937
    %v977 = vunpack.c.l.b16 %v938
    %v978 = vpack.c.b16 %v963, %v962
    %v979 = vpack.c.b16 %v965, %v964
    %v980 = vpack.c.b16 %v967, %v966
    %v981 = vpack.c.b16 %v969, %v968
    %v982 = vpack.c.b16 %v971, %v970
    %v983 = vpack.c.b16 %v973, %v972
    %v984 = vpack.c.b16 %v975, %v974
    %v985 = vpack.c.b16 %v977, %v976
    %994 = vmatprep.subr.bf16.mxu0 0
    %995 = vmatpush1.bf16.msra.mxu0 %v978
    %996 = vmatprep.subr.bf16.mxu0 0
    %997 = vmatpush1.bf16.msra.mxu0 %v979
    %998 = vmatprep.subr.bf16.mxu0 0
    %999 = vmatpush1.bf16.msra.mxu0 %v980
    %1000 = vmatprep.subr.bf16.mxu0 0
    %1001 = vmatpush1.bf16.msra.mxu0 %v981
    %1002 = vmatprep.subr.bf16.mxu0 0
    %1003 = vmatpush1.bf16.msra.mxu0 %v982
    %1004 = vmatprep.subr.bf16.mxu0 0
    %1005 = vmatpush1.bf16.msra.mxu0 %v983
    %1006 = vmatprep.subr.bf16.mxu0 0
    %1007 = vmatpush1.bf16.msra.mxu0 %v984
    %1008 = vmatprep.subr.bf16.mxu0 0
    %1009 = vmatpush1.bf16.msra.mxu0 %v985
    %1010 = vmatprep.subr.bf16.mxu0 0
    %1011 = vmatpush1.bf16.msra.mxu0 0
    %1012 = vmatprep.subr.bf16.mxu0 0
    %1013 = vmatpush1.bf16.msra.mxu0 0
    %1014 = vmatprep.subr.bf16.mxu0 0
    %1015 = vmatpush1.bf16.msra.mxu0 0
    %1016 = vmatprep.subr.bf16.mxu0 0
    %1017 = vmatpush1.bf16.msra.mxu0 0
    %1018 = vmatprep.subr.bf16.mxu0 0
    %1019 = vmatpush1.bf16.msra.mxu0 0
    %1020 = vmatprep.subr.bf16.mxu0 0
    %1021 = vmatpush1.bf16.msra.mxu0 0
    %1022 = vmatprep.subr.bf16.mxu0 0
    %1023 = vmatpush1.bf16.msra.mxu0 0
    %1024 = vmatprep.subr.bf16.mxu0 0
    %1025 = vmatpush1.bf16.msra.mxu0 0
    %1026 = vmatprep.mubr.bf16.mxu0 0
    %1027 = vmatmul.mubr.bf16.gmra.mrb[0].mxu0 %v921
    %v1028 = vpop.f32.mrb[0].mxu0
    %v1029 = vadd.f32 %v944, %v1028
    %v1030 = vpop.f32.mrb[0].mxu0
    %v1031 = vpop.f32.mrb[0].mxu0
    %v1032 = vadd.f32 %v944, %v1031
    %v1033 = vpop.f32.mrb[0].mxu0
    %1034 = vmatprep.mubr.bf16.mxu0 0
    %1035 = vmatmul.mubr.bf16.gmra.mrb[0].mxu0 %v922
    %v1036 = vpop.f32.mrb[0].mxu0
    %v1037 = vadd.f32 %v944, %v1036
    %v1038 = vpop.f32.mrb[0].mxu0
    %v1039 = vpop.f32.mrb[0].mxu0
    %v1040 = vadd.f32 %v944, %v1039
    %v1041 = vpop.f32.mrb[0].mxu0
    %1042 = vdwg.mxu0
    %v1043 = vmax.f32 %v1029, 0.0
    %v1044 = vmax.f32 %v1032, 0.0
    %v1045 = vmax.f32 %v1037, 0.0
    %v1046 = vmax.f32 %v1040, 0.0
    %v1047 = vpack.c.bf16 %v1044, %v1043
    %v1048 = vpack.c.bf16 %v1046, %v1045
    %1049 = vxpose.xlu0.c.b16.start [1/8] %v465, 128
    %1050 = vxpose.xlu0.c.b16.cont [2/8] %v466, 128
    %1051 = vxpose.xlu0.c.b16.cont [3/8] 0, 128
    %1052 = vxpose.xlu0.c.b16.cont [4/8] 0, 128
    %1053 = vxpose.xlu0.c.b16.cont [5/8] 0, 128
    %1054 = vxpose.xlu0.c.b16.cont [6/8] 0, 128
    %1055 = vxpose.xlu0.c.b16.cont [7/8] 0, 128
    %1056 = vxpose.xlu0.c.b16.end [8/8] 0, 128
    %v1057 = vpop.trf.xlu0
    %v1058 = vpop.trf.xlu0
    %v1059 = vpop.trf.xlu0
    %v1060 = vpop.trf.xlu0
    %v1061 = vpop.trf.xlu0
    %v1062 = vpop.trf.xlu0
    %v1063 = vpop.trf.xlu0
    %v1064 = vpop.trf.xlu0
    %vm1065 = vcmask 261120
    %v1067 = vsel %vm1065, %v1057, 0
    %1069 = vmatprep.subr.bf16.mxu0 0
    %1070 = vmatpush1.bf16.msra.mxu0 %v1047
    %1071 = vmatprep.subr.bf16.mxu0 0
    %1072 = vmatpush1.bf16.msra.mxu0 %v1048
    %1073 = vmatprep.subr.bf16.mxu0 0
    %1074 = vmatpush1.bf16.msra.mxu0 0
    %1075 = vmatprep.subr.bf16.mxu0 0
    %1076 = vmatpush1.bf16.msra.mxu0 0
    %1077 = vmatprep.subr.bf16.mxu0 0
    %1078 = vmatpush1.bf16.msra.mxu0 0
    %1079 = vmatprep.subr.bf16.mxu0 0
    %1080 = vmatpush1.bf16.msra.mxu0 0
    %1081 = vmatprep.subr.bf16.mxu0 0
    %1082 = vmatpush1.bf16.msra.mxu0 0
    %1083 = vmatprep.subr.bf16.mxu0 0
    %1084 = vmatpush1.bf16.msra.mxu0 0
    %1085 = vmatprep.subr.bf16.mxu0 0
    %1086 = vmatpush1.bf16.msra.mxu0 0
    %1087 = vmatprep.subr.bf16.mxu0 0
    %1088 = vmatpush1.bf16.msra.mxu0 0
    %1089 = vmatprep.subr.bf16.mxu0 0
    %1090 = vmatpush1.bf16.msra.mxu0 0
    %1091 = vmatprep.subr.bf16.mxu0 0
    %1092 = vmatpush1.bf16.msra.mxu0 0
    %1093 = vmatprep.subr.bf16.mxu0 0
    %1094 = vmatpush1.bf16.msra.mxu0 0
    %1095 = vmatprep.subr.bf16.mxu0 0
    %1096 = vmatpush1.bf16.msra.mxu0 0
    %1097 = vmatprep.subr.bf16.mxu0 0
    %1098 = vmatpush1.bf16.msra.mxu0 0
    %1099 = vmatprep.subr.bf16.mxu0 0
    %1100 = vmatpush1.bf16.msra.mxu0 0
    %1101 = vmatprep.mubr.bf16.mxu0 0
    %1102 = vmatmul.mubr.bf16.gmra.mrb[0].mxu0 %v1067
    %v1103 = vpop.f32.mrb[0].mxu0
    %v1104 = vadd.f32 0.0, %v1103
    %v1105 = vpop.f32.mrb[0].mxu0
    %v1106 = vpop.f32.mrb[0].mxu0
    %v1107 = vadd.f32 0.0, %v1106
    %v1108 = vpop.f32.mrb[0].mxu0
    %1109 = vdwg.mxu0
    %v1110 = vpack.c.bf16 %v1107, %v1104
    %v1111 = vld [vmem:[#allocation15] sm:$0xf]
    %v1112 = vld [vmem:[#allocation15 + $0x4] sm:$0xf]
    %v1113 = vld [vmem:[#allocation15 + $0x8] sm:$0xf]
    %v1114 = vld [vmem:[#allocation15 + $0xc] sm:$0xf]
    %v1115 = vld [vmem:[#allocation15 + $0x10] sm:$0xf]
    %v1116 = vld [vmem:[#allocation15 + $0x14] sm:$0xf]
    %v1117 = vld [vmem:[#allocation15 + $0x18] sm:$0xf]
    %v1118 = vld [vmem:[#allocation15 + $0x1c] sm:$0xf]
    %v1119 = vld [vmem:[#allocation15 + $0x20] sm:$0xf]
    %v1120 = vld [vmem:[#allocation15 + $0x24] sm:$0xf]
    %v1121 = vld [vmem:[#allocation15 + $0x28] sm:$0xf]
    %v1122 = vld [vmem:[#allocation15 + $0x2c] sm:$0xf]
    %v1123 = vld [vmem:[#allocation15 + $0x30] sm:$0xf]
    %v1124 = vld [vmem:[#allocation15 + $0x34] sm:$0xf]
    %v1125 = vld [vmem:[#allocation15 + $0x38] sm:$0xf]
    %v1126 = vld [vmem:[#allocation15 + $0x3c] sm:$0xf]
    %v1127 = vld [vmem:[#allocation17] sm:$0xf]
    %v1128 = vld [vmem:[#allocation17 + $0x4] sm:$0xf]
    %v1129 = vld [vmem:[#allocation17 + $0x8] sm:$0xf]
    %v1130 = vld [vmem:[#allocation17 + $0xc] sm:$0xf]
    %v1131 = vld [vmem:[#allocation17 + $0x10] sm:$0xf]
    %v1132 = vld [vmem:[#allocation17 + $0x14] sm:$0xf]
    %v1133 = vld [vmem:[#allocation17 + $0x18] sm:$0xf]
    %v1134 = vld [vmem:[#allocation17 + $0x1c] sm:$0xf]
    %v1135 = vld [vmem:[#allocation17 + $0x20] sm:$0xf]
    %v1136 = vld [vmem:[#allocation17 + $0x24] sm:$0xf]
    %v1137 = vld [vmem:[#allocation17 + $0x28] sm:$0xf]
    %v1138 = vld [vmem:[#allocation17 + $0x2c] sm:$0xf]
    %v1139 = vld [vmem:[#allocation17 + $0x30] sm:$0xf]
    %v1140 = vld [vmem:[#allocation17 + $0x34] sm:$0xf]
    %v1141 = vld [vmem:[#allocation17 + $0x38] sm:$0xf]
    %v1142 = vld [vmem:[#allocation17 + $0x3c] sm:$0xf]
    %v1159 = vunpack.c.l.b16 %v1127
    %v1160 = vunpack.c.l.b16 %v1128
    %v1161 = vunpack.c.l.b16 %v1129
    %v1162 = vunpack.c.l.b16 %v1130
    %v1163 = vunpack.c.l.b16 %v1131
    %v1164 = vunpack.c.l.b16 %v1132
    %v1165 = vunpack.c.l.b16 %v1133
    %v1166 = vunpack.c.l.b16 %v1134
    %v1167 = vunpack.c.l.b16 %v1135
    %v1168 = vunpack.c.l.b16 %v1136
    %v1169 = vunpack.c.l.b16 %v1137
    %v1170 = vunpack.c.l.b16 %v1138
    %v1171 = vunpack.c.l.b16 %v1139
    %v1172 = vunpack.c.l.b16 %v1140
    %v1173 = vunpack.c.l.b16 %v1141
    %v1174 = vunpack.c.l.b16 %v1142
    %v1175 = vpack.c.b16 %v1160, %v1159
    %v1176 = vpack.c.b16 %v1162, %v1161
    %v1177 = vpack.c.b16 %v1164, %v1163
    %v1178 = vpack.c.b16 %v1166, %v1165
    %v1179 = vpack.c.b16 %v1168, %v1167
    %v1180 = vpack.c.b16 %v1170, %v1169
    %v1181 = vpack.c.b16 %v1172, %v1171
    %v1182 = vpack.c.b16 %v1174, %v1173
    %1191 = vmatprep.subr.bf16.mxu0 0
    %1192 = vmatpush1.bf16.msra.mxu0 %v1175
    %1193 = vmatprep.subr.bf16.mxu0 0
    %1194 = vmatpush1.bf16.msra.mxu0 %v1176
    %1195 = vmatprep.subr.bf16.mxu0 0
    %1196 = vmatpush1.bf16.msra.mxu0 %v1177
    %1197 = vmatprep.subr.bf16.mxu0 0
    %1198 = vmatpush1.bf16.msra.mxu0 %v1178
    %1199 = vmatprep.subr.bf16.mxu0 0
    %1200 = vmatpush1.bf16.msra.mxu0 %v1179
    %1201 = vmatprep.subr.bf16.mxu0 0
    %1202 = vmatpush1.bf16.msra.mxu0 %v1180
    %1203 = vmatprep.subr.bf16.mxu0 0
    %1204 = vmatpush1.bf16.msra.mxu0 %v1181
    %1205 = vmatprep.subr.bf16.mxu0 0
    %1206 = vmatpush1.bf16.msra.mxu0 %v1182
    %1207 = vmatprep.subr.bf16.mxu0 0
    %1208 = vmatpush1.bf16.msra.mxu0 0
    %1209 = vmatprep.subr.bf16.mxu0 0
    %1210 = vmatpush1.bf16.msra.mxu0 0
    %1211 = vmatprep.subr.bf16.mxu0 0
    %1212 = vmatpush1.bf16.msra.mxu0 0
    %1213 = vmatprep.subr.bf16.mxu0 0
    %1214 = vmatpush1.bf16.msra.mxu0 0
    %1215 = vmatprep.subr.bf16.mxu0 0
    %1216 = vmatpush1.bf16.msra.mxu0 0
    %1217 = vmatprep.subr.bf16.mxu0 0
    %1218 = vmatpush1.bf16.msra.mxu0 0
    %1219 = vmatprep.subr.bf16.mxu0 0
    %1220 = vmatpush1.bf16.msra.mxu0 0
    %1221 = vmatprep.subr.bf16.mxu0 0
    %1222 = vmatpush1.bf16.msra.mxu0 0
    %1223 = vmatprep.mubr.bf16.mxu0 0
    %1224 = vmatmul.mubr.bf16.gmra.mrb[0].mxu0 %v1110
    %v1225 = vpop.f32.mrb[0].mxu0
    %v1226 = vadd.f32 0.0, %v1225
    %v1227 = vpop.f32.mrb[0].mxu0
    %v1228 = vpop.f32.mrb[0].mxu0
    %v1229 = vadd.f32 0.0, %v1228
    %v1230 = vpop.f32.mrb[0].mxu0
    %1231 = vdwg.mxu0
    %v1248 = vunpack.c.l.b16 %v1111
    %v1249 = vunpack.c.l.b16 %v1112
    %v1250 = vunpack.c.l.b16 %v1113
    %v1251 = vunpack.c.l.b16 %v1114
    %v1252 = vunpack.c.l.b16 %v1115
    %v1253 = vunpack.c.l.b16 %v1116
    %v1254 = vunpack.c.l.b16 %v1117
    %v1255 = vunpack.c.l.b16 %v1118
    %v1256 = vunpack.c.l.b16 %v1119
    %v1257 = vunpack.c.l.b16 %v1120
    %v1258 = vunpack.c.l.b16 %v1121
    %v1259 = vunpack.c.l.b16 %v1122
    %v1260 = vunpack.c.l.b16 %v1123
    %v1261 = vunpack.c.l.b16 %v1124
    %v1262 = vunpack.c.l.b16 %v1125
    %v1263 = vunpack.c.l.b16 %v1126
    %v1264 = vpack.c.b16 %v1249, %v1248
    %v1265 = vpack.c.b16 %v1251, %v1250
    %v1266 = vpack.c.b16 %v1253, %v1252
    %v1267 = vpack.c.b16 %v1255, %v1254
    %v1268 = vpack.c.b16 %v1257, %v1256
    %v1269 = vpack.c.b16 %v1259, %v1258
    %v1270 = vpack.c.b16 %v1261, %v1260
    %v1271 = vpack.c.b16 %v1263, %v1262
    %1280 = vmatprep.subr.bf16.mxu0 0
    %1281 = vmatpush1.bf16.msra.mxu0 %v1264
    %1282 = vmatprep.subr.bf16.mxu0 0
    %1283 = vmatpush1.bf16.msra.mxu0 %v1265
    %1284 = vmatprep.subr.bf16.mxu0 0
    %1285 = vmatpush1.bf16.msra.mxu0 %v1266
    %1286 = vmatprep.subr.bf16.mxu0 0
    %1287 = vmatpush1.bf16.msra.mxu0 %v1267
    %1288 = vmatprep.subr.bf16.mxu0 0
    %1289 = vmatpush1.bf16.msra.mxu0 %v1268
    %1290 = vmatprep.subr.bf16.mxu0 0
    %1291 = vmatpush1.bf16.msra.mxu0 %v1269
    %1292 = vmatprep.subr.bf16.mxu0 0
    %1293 = vmatpush1.bf16.msra.mxu0 %v1270
    %1294 = vmatprep.subr.bf16.mxu0 0
    %1295 = vmatpush1.bf16.msra.mxu0 %v1271
    %1296 = vmatprep.subr.bf16.mxu0 0
    %1297 = vmatpush1.bf16.msra.mxu0 0
    %1298 = vmatprep.subr.bf16.mxu0 0
    %1299 = vmatpush1.bf16.msra.mxu0 0
    %1300 = vmatprep.subr.bf16.mxu0 0
    %1301 = vmatpush1.bf16.msra.mxu0 0
    %1302 = vmatprep.subr.bf16.mxu0 0
    %1303 = vmatpush1.bf16.msra.mxu0 0
    %1304 = vmatprep.subr.bf16.mxu0 0
    %1305 = vmatpush1.bf16.msra.mxu0 0
    %1306 = vmatprep.subr.bf16.mxu0 0
    %1307 = vmatpush1.bf16.msra.mxu0 0
    %1308 = vmatprep.subr.bf16.mxu0 0
    %1309 = vmatpush1.bf16.msra.mxu0 0
    %1310 = vmatprep.subr.bf16.mxu0 0
    %1311 = vmatpush1.bf16.msra.mxu0 0
    %1312 = vmatprep.mubr.bf16.mxu0 0
    %1313 = vmatmul.mubr.bf16.gmra.mrb[0].mxu0 %v314
    %v1314 = vpop.f32.mrb[0].mxu0
    %v1315 = vadd.f32 %v1226, %v1314
    %v1316 = vpop.f32.mrb[0].mxu0
    %v1317 = vpop.f32.mrb[0].mxu0
    %v1318 = vadd.f32 %v1229, %v1317
    %v1319 = vpop.f32.mrb[0].mxu0
    %1320 = vdwg.mxu0
    %v1321 = vld [vmem:[%s16] sm:$0x1]
    %v1323 = vlaneseq
    %v1324 = vshrl.u32 %v1323, 7
    %v1325 = vsub.s32 0, %v1324
    %v1326 = vrot.slane %v1321, %v1325
    %v1328 = vadd.f32 %v1315, %v1326
    %v1329 = vadd.f32 %v1318, %v1326
    %v1330 = vmax.f32 %v1328, 0.0
    %v1331 = vmax.f32 %v1329, 0.0
    %v1332 = vpack.c.bf16 %v1331, %v1330
    %v1333 = vld [vmem:[#allocation18] sm:$0xf]
    %v1334 = vld [vmem:[#allocation18 + $0x4] sm:$0xf]
    %v1335 = vld [vmem:[#allocation18 + $0x8] sm:$0xf]
    %v1336 = vld [vmem:[#allocation18 + $0xc] sm:$0xf]
    %v1337 = vld [vmem:[#allocation18 + $0x10] sm:$0xf]
    %v1338 = vld [vmem:[#allocation18 + $0x14] sm:$0xf]
    %v1339 = vld [vmem:[#allocation18 + $0x18] sm:$0xf]
    %v1340 = vld [vmem:[#allocation18 + $0x1c] sm:$0xf]
    %v1341 = vld [vmem:[#allocation18 + $0x20] sm:$0xf]
    %v1342 = vld [vmem:[#allocation18 + $0x24] sm:$0xf]
    %v1343 = vld [vmem:[#allocation18 + $0x28] sm:$0xf]
    %v1344 = vld [vmem:[#allocation18 + $0x2c] sm:$0xf]
    %v1345 = vld [vmem:[#allocation18 + $0x30] sm:$0xf]
    %v1346 = vld [vmem:[#allocation18 + $0x34] sm:$0xf]
    %v1347 = vld [vmem:[#allocation18 + $0x38] sm:$0xf]
    %v1348 = vld [vmem:[#allocation18 + $0x3c] sm:$0xf]
    %v1349 = vld [vmem:[%s18] sm:$0x1]
    %v1351 = vlaneseq
    %v1352 = vshrl.u32 %v1351, 7
    %v1353 = vsub.s32 0, %v1352
    %v1354 = vrot.slane %v1349, %v1353
    %v1372 = vunpack.c.l.b16 %v1333
    %v1373 = vunpack.c.l.b16 %v1334
    %v1374 = vunpack.c.l.b16 %v1335
    %v1375 = vunpack.c.l.b16 %v1336
    %v1376 = vunpack.c.l.b16 %v1337
    %v1377 = vunpack.c.l.b16 %v1338
    %v1378 = vunpack.c.l.b16 %v1339
    %v1379 = vunpack.c.l.b16 %v1340
    %v1380 = vunpack.c.l.b16 %v1341
    %v1381 = vunpack.c.l.b16 %v1342
    %v1382 = vunpack.c.l.b16 %v1343
    %v1383 = vunpack.c.l.b16 %v1344
    %v1384 = vunpack.c.l.b16 %v1345
    %v1385 = vunpack.c.l.b16 %v1346
    %v1386 = vunpack.c.l.b16 %v1347
    %v1387 = vunpack.c.l.b16 %v1348
    %v1388 = vpack.c.b16 %v1373, %v1372
    %v1389 = vpack.c.b16 %v1375, %v1374
    %v1390 = vpack.c.b16 %v1377, %v1376
    %v1391 = vpack.c.b16 %v1379, %v1378
    %v1392 = vpack.c.b16 %v1381, %v1380
    %v1393 = vpack.c.b16 %v1383, %v1382
    %v1394 = vpack.c.b16 %v1385, %v1384
    %v1395 = vpack.c.b16 %v1387, %v1386
    %1404 = vmatprep.subr.bf16.mxu0 0
    %1405 = vmatpush1.bf16.msra.mxu0 %v1388
    %1406 = vmatprep.subr.bf16.mxu0 0
    %1407 = vmatpush1.bf16.msra.mxu0 %v1389
    %1408 = vmatprep.subr.bf16.mxu0 0
    %1409 = vmatpush1.bf16.msra.mxu0 %v1390
    %1410 = vmatprep.subr.bf16.mxu0 0
    %1411 = vmatpush1.bf16.msra.mxu0 %v1391
    %1412 = vmatprep.subr.bf16.mxu0 0
    %1413 = vmatpush1.bf16.msra.mxu0 %v1392
    %1414 = vmatprep.subr.bf16.mxu0 0
    %1415 = vmatpush1.bf16.msra.mxu0 %v1393
    %1416 = vmatprep.subr.bf16.mxu0 0
    %1417 = vmatpush1.bf16.msra.mxu0 %v1394
    %1418 = vmatprep.subr.bf16.mxu0 0
    %1419 = vmatpush1.bf16.msra.mxu0 %v1395
    %1420 = vmatprep.subr.bf16.mxu0 0
    %1421 = vmatpush1.bf16.msra.mxu0 0
    %1422 = vmatprep.subr.bf16.mxu0 0
    %1423 = vmatpush1.bf16.msra.mxu0 0
    %1424 = vmatprep.subr.bf16.mxu0 0
    %1425 = vmatpush1.bf16.msra.mxu0 0
    %1426 = vmatprep.subr.bf16.mxu0 0
    %1427 = vmatpush1.bf16.msra.mxu0 0
    %1428 = vmatprep.subr.bf16.mxu0 0
    %1429 = vmatpush1.bf16.msra.mxu0 0
    %1430 = vmatprep.subr.bf16.mxu0 0
    %1431 = vmatpush1.bf16.msra.mxu0 0
    %1432 = vmatprep.subr.bf16.mxu0 0
    %1433 = vmatpush1.bf16.msra.mxu0 0
    %1434 = vmatprep.subr.bf16.mxu0 0
    %1435 = vmatpush1.bf16.msra.mxu0 0
    %1436 = vmatprep.mubr.bf16.mxu0 0
    %1437 = vmatmul.mubr.bf16.gmra.mrb[0].mxu0 %v1332
    %v1438 = vpop.f32.mrb[0].mxu0
    %v1439 = vadd.f32 %v1354, %v1438
    %v1440 = vpop.f32.mrb[0].mxu0
    %v1441 = vpop.f32.mrb[0].mxu0
    %v1442 = vadd.f32 %v1354, %v1441
    %v1443 = vpop.f32.mrb[0].mxu0
    %1444 = vdwg.mxu0
    %v1445 = vmax.f32 %v1439, 0.0
    %v1446 = vmax.f32 %v1442, 0.0
    %v1447 = vpack.c.bf16 %v1446, %v1445
    %s1448 = scalar_lea.vmem [#allocation12], 64
    %v1449 = vld [vmem:[%s1448] sm:$0xf]
    %v1450 = vld [vmem:[%s1448 + $0x4] sm:$0xf]
    %v1451 = vld [vmem:[%s1448 + $0x8] sm:$0xf]
    %v1452 = vld [vmem:[%s1448 + $0xc] sm:$0xf]
    %v1453 = vld [vmem:[%s1448 + $0x10] sm:$0xf]
    %v1454 = vld [vmem:[%s1448 + $0x14] sm:$0xf]
    %v1455 = vld [vmem:[%s1448 + $0x18] sm:$0xf]
    %v1456 = vld [vmem:[%s1448 + $0x1c] sm:$0xf]
    %v1457 = vld [vmem:[%s1448 + $0x20] sm:$0xf]
    %v1458 = vld [vmem:[%s1448 + $0x24] sm:$0xf]
    %v1459 = vld [vmem:[%s1448 + $0x28] sm:$0xf]
    %v1460 = vld [vmem:[%s1448 + $0x2c] sm:$0xf]
    %v1461 = vld [vmem:[%s1448 + $0x30] sm:$0xf]
    %v1462 = vld [vmem:[%s1448 + $0x34] sm:$0xf]
    %v1463 = vld [vmem:[%s1448 + $0x38] sm:$0xf]
    %v1464 = vld [vmem:[%s1448 + $0x3c] sm:$0xf]
    %v1481 = vunpack.c.l.b16 %v1449
    %v1482 = vunpack.c.l.b16 %v1450
    %v1483 = vunpack.c.l.b16 %v1451
    %v1484 = vunpack.c.l.b16 %v1452
    %v1485 = vunpack.c.l.b16 %v1453
    %v1486 = vunpack.c.l.b16 %v1454
    %v1487 = vunpack.c.l.b16 %v1455
    %v1488 = vunpack.c.l.b16 %v1456
    %v1489 = vunpack.c.l.b16 %v1457
    %v1490 = vunpack.c.l.b16 %v1458
    %v1491 = vunpack.c.l.b16 %v1459
    %v1492 = vunpack.c.l.b16 %v1460
    %v1493 = vunpack.c.l.b16 %v1461
    %v1494 = vunpack.c.l.b16 %v1462
    %v1495 = vunpack.c.l.b16 %v1463
    %v1496 = vunpack.c.l.b16 %v1464
    %v1497 = vpack.c.b16 %v1482, %v1481
    %v1498 = vpack.c.b16 %v1484, %v1483
    %v1499 = vpack.c.b16 %v1486, %v1485
    %v1500 = vpack.c.b16 %v1488, %v1487
    %v1501 = vpack.c.b16 %v1490, %v1489
    %v1502 = vpack.c.b16 %v1492, %v1491
    %v1503 = vpack.c.b16 %v1494, %v1493
    %v1504 = vpack.c.b16 %v1496, %v1495
    %1513 = vmatprep.subr.bf16.mxu0 0
    %1514 = vmatpush1.bf16.msra.mxu0 %v1497
    %1515 = vmatprep.subr.bf16.mxu0 0
    %1516 = vmatpush1.bf16.msra.mxu0 %v1498
    %1517 = vmatprep.subr.bf16.mxu0 0
    %1518 = vmatpush1.bf16.msra.mxu0 %v1499
    %1519 = vmatprep.subr.bf16.mxu0 0
    %1520 = vmatpush1.bf16.msra.mxu0 %v1500
    %1521 = vmatprep.subr.bf16.mxu0 0
    %1522 = vmatpush1.bf16.msra.mxu0 %v1501
    %1523 = vmatprep.subr.bf16.mxu0 0
    %1524 = vmatpush1.bf16.msra.mxu0 %v1502
    %1525 = vmatprep.subr.bf16.mxu0 0
    %1526 = vmatpush1.bf16.msra.mxu0 %v1503
    %1527 = vmatprep.subr.bf16.mxu0 0
    %1528 = vmatpush1.bf16.msra.mxu0 %v1504
    %1529 = vmatprep.subr.bf16.mxu0 0
    %1530 = vmatpush1.bf16.msra.mxu0 0
    %1531 = vmatprep.subr.bf16.mxu0 0
    %1532 = vmatpush1.bf16.msra.mxu0 0
    %1533 = vmatprep.subr.bf16.mxu0 0
    %1534 = vmatpush1.bf16.msra.mxu0 0
    %1535 = vmatprep.subr.bf16.mxu0 0
    %1536 = vmatpush1.bf16.msra.mxu0 0
    %1537 = vmatprep.subr.bf16.mxu0 0
    %1538 = vmatpush1.bf16.msra.mxu0 0
    %1539 = vmatprep.subr.bf16.mxu0 0
    %1540 = vmatpush1.bf16.msra.mxu0 0
    %1541 = vmatprep.subr.bf16.mxu0 0
    %1542 = vmatpush1.bf16.msra.mxu0 0
    %1543 = vmatprep.subr.bf16.mxu0 0
    %1544 = vmatpush1.bf16.msra.mxu0 0
    %1545 = vmatprep.mubr.bf16.mxu0 0
    %1546 = vmatmul.mubr.bf16.gmra.mrb[0].mxu0 %v1447
    %v1547 = vpop.f32.mrb[0].mxu0
    %v1548 = vadd.f32 0.0, %v1547
    %v1549 = vpop.f32.mrb[0].mxu0
    %v1550 = vpop.f32.mrb[0].mxu0
    %v1551 = vadd.f32 0.0, %v1550
    %v1552 = vpop.f32.mrb[0].mxu0
    %1553 = vdwg.mxu0
    %v1554 = vpack.c.bf16 %v1551, %v1548
    %s1555 = scalar_lea.vmem %s10, 64
    %v1556 = vld [vmem:[%s1555] sm:$0xf]
    %v1557 = vld [vmem:[%s1555 + $0x4] sm:$0xf]
    %v1558 = vld [vmem:[%s1555 + $0x8] sm:$0xf]
    %v1559 = vld [vmem:[%s1555 + $0xc] sm:$0xf]
    %v1560 = vld [vmem:[%s1555 + $0x10] sm:$0xf]
    %v1561 = vld [vmem:[%s1555 + $0x14] sm:$0xf]
    %v1562 = vld [vmem:[%s1555 + $0x18] sm:$0xf]
    %v1563 = vld [vmem:[%s1555 + $0x1c] sm:$0xf]
    %v1564 = vld [vmem:[%s1555 + $0x20] sm:$0xf]
    %v1565 = vld [vmem:[%s1555 + $0x24] sm:$0xf]
    %v1566 = vld [vmem:[%s1555 + $0x28] sm:$0xf]
    %v1567 = vld [vmem:[%s1555 + $0x2c] sm:$0xf]
    %v1568 = vld [vmem:[%s1555 + $0x30] sm:$0xf]
    %v1569 = vld [vmem:[%s1555 + $0x34] sm:$0xf]
    %v1570 = vld [vmem:[%s1555 + $0x38] sm:$0xf]
    %v1571 = vld [vmem:[%s1555 + $0x3c] sm:$0xf]
    %v1588 = vunpack.c.l.b16 %v1556
    %v1589 = vunpack.c.l.b16 %v1557
    %v1590 = vunpack.c.l.b16 %v1558
    %v1591 = vunpack.c.l.b16 %v1559
    %v1592 = vunpack.c.l.b16 %v1560
    %v1593 = vunpack.c.l.b16 %v1561
    %v1594 = vunpack.c.l.b16 %v1562
    %v1595 = vunpack.c.l.b16 %v1563
    %v1596 = vunpack.c.l.b16 %v1564
    %v1597 = vunpack.c.l.b16 %v1565
    %v1598 = vunpack.c.l.b16 %v1566
    %v1599 = vunpack.c.l.b16 %v1567
    %v1600 = vunpack.c.l.b16 %v1568
    %v1601 = vunpack.c.l.b16 %v1569
    %v1602 = vunpack.c.l.b16 %v1570
    %v1603 = vunpack.c.l.b16 %v1571
    %v1604 = vpack.c.b16 %v1589, %v1588
    %v1605 = vpack.c.b16 %v1591, %v1590
    %v1606 = vpack.c.b16 %v1593, %v1592
    %v1607 = vpack.c.b16 %v1595, %v1594
    %v1608 = vpack.c.b16 %v1597, %v1596
    %v1609 = vpack.c.b16 %v1599, %v1598
    %v1610 = vpack.c.b16 %v1601, %v1600
    %v1611 = vpack.c.b16 %v1603, %v1602
    %1620 = vmatprep.subr.bf16.mxu0 0
    %1621 = vmatpush1.bf16.msra.mxu0 %v1604
    %1622 = vmatprep.subr.bf16.mxu0 0
    %1623 = vmatpush1.bf16.msra.mxu0 %v1605
    %1624 = vmatprep.subr.bf16.mxu0 0
    %1625 = vmatpush1.bf16.msra.mxu0 %v1606
    %1626 = vmatprep.subr.bf16.mxu0 0
    %1627 = vmatpush1.bf16.msra.mxu0 %v1607
    %1628 = vmatprep.subr.bf16.mxu0 0
    %1629 = vmatpush1.bf16.msra.mxu0 %v1608
    %1630 = vmatprep.subr.bf16.mxu0 0
    %1631 = vmatpush1.bf16.msra.mxu0 %v1609
    %1632 = vmatprep.subr.bf16.mxu0 0
    %1633 = vmatpush1.bf16.msra.mxu0 %v1610
    %1634 = vmatprep.subr.bf16.mxu0 0
    %1635 = vmatpush1.bf16.msra.mxu0 %v1611
    %1636 = vmatprep.subr.bf16.mxu0 0
    %1637 = vmatpush1.bf16.msra.mxu0 0
    %1638 = vmatprep.subr.bf16.mxu0 0
    %1639 = vmatpush1.bf16.msra.mxu0 0
    %1640 = vmatprep.subr.bf16.mxu0 0
    %1641 = vmatpush1.bf16.msra.mxu0 0
    %1642 = vmatprep.subr.bf16.mxu0 0
    %1643 = vmatpush1.bf16.msra.mxu0 0
    %1644 = vmatprep.subr.bf16.mxu0 0
    %1645 = vmatpush1.bf16.msra.mxu0 0
    %1646 = vmatprep.subr.bf16.mxu0 0
    %1647 = vmatpush1.bf16.msra.mxu0 0
    %1648 = vmatprep.subr.bf16.mxu0 0
    %1649 = vmatpush1.bf16.msra.mxu0 0
    %1650 = vmatprep.subr.bf16.mxu0 0
    %1651 = vmatpush1.bf16.msra.mxu0 0
    %1652 = vmatprep.mubr.bf16.mxu0 0
    %1653 = vmatmul.mubr.bf16.gmra.mrb[0].mxu0 %v1447
    %v1654 = vpop.f32.mrb[0].mxu0
    %v1655 = vadd.f32 0.0, %v1654
    %v1656 = vpop.f32.mrb[0].mxu0
    %v1657 = vpop.f32.mrb[0].mxu0
    %v1658 = vadd.f32 0.0, %v1657
    %v1659 = vpop.f32.mrb[0].mxu0
    %1660 = vdwg.mxu0
    %v1661 = vpack.c.bf16 %v1658, %v1655
    %s1662 = scalar_lea.vmem [#allocation11], 64
    %v1663 = vld [vmem:[%s1662] sm:$0xf]
    %v1664 = vld [vmem:[%s1662 + $0x4] sm:$0xf]
    %v1665 = vld [vmem:[%s1662 + $0x8] sm:$0xf]
    %v1666 = vld [vmem:[%s1662 + $0xc] sm:$0xf]
    %v1667 = vld [vmem:[%s1662 + $0x10] sm:$0xf]
    %v1668 = vld [vmem:[%s1662 + $0x14] sm:$0xf]
    %v1669 = vld [vmem:[%s1662 + $0x18] sm:$0xf]
    %v1670 = vld [vmem:[%s1662 + $0x1c] sm:$0xf]
    %v1671 = vld [vmem:[%s1662 + $0x20] sm:$0xf]
    %v1672 = vld [vmem:[%s1662 + $0x24] sm:$0xf]
    %v1673 = vld [vmem:[%s1662 + $0x28] sm:$0xf]
    %v1674 = vld [vmem:[%s1662 + $0x2c] sm:$0xf]
    %v1675 = vld [vmem:[%s1662 + $0x30] sm:$0xf]
    %v1676 = vld [vmem:[%s1662 + $0x34] sm:$0xf]
    %v1677 = vld [vmem:[%s1662 + $0x38] sm:$0xf]
    %v1678 = vld [vmem:[%s1662 + $0x3c] sm:$0xf]
    %1679 = vmatprep.subr.bf16.mxu0 0
    %1680 = vmatpush1.bf16.msra.mxu0 %v1554
    %1681 = vmatprep.subr.bf16.mxu0 0
    %1682 = vmatpush1.bf16.msra.mxu0 0
    %1683 = vmatprep.subr.bf16.mxu0 0
    %1684 = vmatpush1.bf16.msra.mxu0 0
    %1685 = vmatprep.subr.bf16.mxu0 0
    %1686 = vmatpush1.bf16.msra.mxu0 0
    %1687 = vmatprep.subr.bf16.mxu0 0
    %1688 = vmatpush1.bf16.msra.mxu0 0
    %1689 = vmatprep.subr.bf16.mxu0 0
    %1690 = vmatpush1.bf16.msra.mxu0 0
    %1691 = vmatprep.subr.bf16.mxu0 0
    %1692 = vmatpush1.bf16.msra.mxu0 0
    %1693 = vmatprep.subr.bf16.mxu0 0
    %1694 = vmatpush1.bf16.msra.mxu0 0
    %1695 = vmatprep.subr.bf16.mxu0 0
    %1696 = vmatpush1.bf16.msra.mxu0 0
    %1697 = vmatprep.subr.bf16.mxu0 0
    %1698 = vmatpush1.bf16.msra.mxu0 0
    %1699 = vmatprep.subr.bf16.mxu0 0
    %1700 = vmatpush1.bf16.msra.mxu0 0
    %1701 = vmatprep.subr.bf16.mxu0 0
    %1702 = vmatpush1.bf16.msra.mxu0 0
    %1703 = vmatprep.subr.bf16.mxu0 0
    %1704 = vmatpush1.bf16.msra.mxu0 0
    %1705 = vmatprep.subr.bf16.mxu0 0
    %1706 = vmatpush1.bf16.msra.mxu0 0
    %1707 = vmatprep.subr.bf16.mxu0 0
    %1708 = vmatpush1.bf16.msra.mxu0 0
    %1709 = vmatprep.subr.bf16.mxu0 0
    %1710 = vmatpush1.bf16.msra.mxu0 0
    %1711 = vmatprep.mubr.bf16.mxu0 0
    %1712 = vmatmul.mubr.bf16.gmra.mrb[0].mxu0 %v696
    %v1713 = vpop.f32.mrb[0].mxu0
    %v1714 = vadd.f32 0.0, %v1713
    %v1715 = vpop.f32.mrb[0].mxu0
    %v1716 = vpop.f32.mrb[0].mxu0
    %v1717 = vadd.f32 0.0, %v1716
    %v1718 = vpop.f32.mrb[0].mxu0
    %1719 = vmatprep.mubr.bf16.mxu0 0
    %1720 = vmatmul.mubr.bf16.gmra.mrb[0].mxu0 %v699
    %v1721 = vpop.f32.mrb[0].mxu0
    %v1722 = vadd.f32 0.0, %v1721
    %v1723 = vpop.f32.mrb[0].mxu0
    %v1724 = vpop.f32.mrb[0].mxu0
    %v1725 = vadd.f32 0.0, %v1724
    %v1726 = vpop.f32.mrb[0].mxu0
    %1727 = vdwg.mxu0
    %v1744 = vunpack.c.l.b16 %v1663
    %v1745 = vunpack.c.l.b16 %v1664
    %v1746 = vunpack.c.l.b16 %v1665
    %v1747 = vunpack.c.l.b16 %v1666
    %v1748 = vunpack.c.l.b16 %v1667
    %v1749 = vunpack.c.l.b16 %v1668
    %v1750 = vunpack.c.l.b16 %v1669
    %v1751 = vunpack.c.l.b16 %v1670
    %v1752 = vunpack.c.l.b16 %v1671
    %v1753 = vunpack.c.l.b16 %v1672
    %v1754 = vunpack.c.l.b16 %v1673
    %v1755 = vunpack.c.l.b16 %v1674
    %v1756 = vunpack.c.l.b16 %v1675
    %v1757 = vunpack.c.l.b16 %v1676
    %v1758 = vunpack.c.l.b16 %v1677
    %v1759 = vunpack.c.l.b16 %v1678
    %v1760 = vpack.c.b16 %v1745, %v1744
    %v1761 = vpack.c.b16 %v1747, %v1746
    %v1762 = vpack.c.b16 %v1749, %v1748
    %v1763 = vpack.c.b16 %v1751, %v1750
    %v1764 = vpack.c.b16 %v1753, %v1752
    %v1765 = vpack.c.b16 %v1755, %v1754
    %v1766 = vpack.c.b16 %v1757, %v1756
    %v1767 = vpack.c.b16 %v1759, %v1758
    %1776 = vmatprep.subr.bf16.mxu0 0
    %1777 = vmatpush1.bf16.msra.mxu0 %v1760
    %1778 = vmatprep.subr.bf16.mxu0 0
    %1779 = vmatpush1.bf16.msra.mxu0 %v1761
    %1780 = vmatprep.subr.bf16.mxu0 0
    %1781 = vmatpush1.bf16.msra.mxu0 %v1762
    %1782 = vmatprep.subr.bf16.mxu0 0
    %1783 = vmatpush1.bf16.msra.mxu0 %v1763
    %1784 = vmatprep.subr.bf16.mxu0 0
    %1785 = vmatpush1.bf16.msra.mxu0 %v1764
    %1786 = vmatprep.subr.bf16.mxu0 0
    %1787 = vmatpush1.bf16.msra.mxu0 %v1765
    %1788 = vmatprep.subr.bf16.mxu0 0
    %1789 = vmatpush1.bf16.msra.mxu0 %v1766
    %1790 = vmatprep.subr.bf16.mxu0 0
    %1791 = vmatpush1.bf16.msra.mxu0 %v1767
    %1792 = vmatprep.subr.bf16.mxu0 0
    %1793 = vmatpush1.bf16.msra.mxu0 0
    %1794 = vmatprep.subr.bf16.mxu0 0
    %1795 = vmatpush1.bf16.msra.mxu0 0
    %1796 = vmatprep.subr.bf16.mxu0 0
    %1797 = vmatpush1.bf16.msra.mxu0 0
    %1798 = vmatprep.subr.bf16.mxu0 0
    %1799 = vmatpush1.bf16.msra.mxu0 0
    %1800 = vmatprep.subr.bf16.mxu0 0
    %1801 = vmatpush1.bf16.msra.mxu0 0
    %1802 = vmatprep.subr.bf16.mxu0 0
    %1803 = vmatpush1.bf16.msra.mxu0 0
    %1804 = vmatprep.subr.bf16.mxu0 0
    %1805 = vmatpush1.bf16.msra.mxu0 0
    %1806 = vmatprep.subr.bf16.mxu0 0
    %1807 = vmatpush1.bf16.msra.mxu0 0
    %1808 = vmatprep.mubr.bf16.mxu0 0
    %1809 = vmatmul.mubr.bf16.gmra.mrb[0].mxu0 %v1047
    %v1810 = vpop.f32.mrb[0].mxu0
    %v1811 = vadd.f32 %v1714, %v1810
    %v1812 = vpop.f32.mrb[0].mxu0
    %v1813 = vpop.f32.mrb[0].mxu0
    %v1814 = vadd.f32 %v1717, %v1813
    %v1815 = vpop.f32.mrb[0].mxu0
    %1816 = vmatprep.mubr.bf16.mxu0 0
    %1817 = vmatmul.mubr.bf16.gmra.mrb[0].mxu0 %v1048
    %v1818 = vpop.f32.mrb[0].mxu0
    %v1819 = vadd.f32 %v1722, %v1818
    %v1820 = vpop.f32.mrb[0].mxu0
    %v1821 = vpop.f32.mrb[0].mxu0
    %v1822 = vadd.f32 %v1725, %v1821
    %v1823 = vpop.f32.mrb[0].mxu0
    %1824 = vdwg.mxu0
    %1825 = vmatprep.subr.bf16.mxu0 0
    %1826 = vmatpush1.bf16.msra.mxu0 %v1661
    %1827 = vmatprep.subr.bf16.mxu0 0
    %1828 = vmatpush1.bf16.msra.mxu0 0
    %1829 = vmatprep.subr.bf16.mxu0 0
    %1830 = vmatpush1.bf16.msra.mxu0 0
    %1831 = vmatprep.subr.bf16.mxu0 0
    %1832 = vmatpush1.bf16.msra.mxu0 0
    %1833 = vmatprep.subr.bf16.mxu0 0
    %1834 = vmatpush1.bf16.msra.mxu0 0
    %1835 = vmatprep.subr.bf16.mxu0 0
    %1836 = vmatpush1.bf16.msra.mxu0 0
    %1837 = vmatprep.subr.bf16.mxu0 0
    %1838 = vmatpush1.bf16.msra.mxu0 0
    %1839 = vmatprep.subr.bf16.mxu0 0
    %1840 = vmatpush1.bf16.msra.mxu0 0
    %1841 = vmatprep.subr.bf16.mxu0 0
    %1842 = vmatpush1.bf16.msra.mxu0 0
    %1843 = vmatprep.subr.bf16.mxu0 0
    %1844 = vmatpush1.bf16.msra.mxu0 0
    %1845 = vmatprep.subr.bf16.mxu0 0
    %1846 = vmatpush1.bf16.msra.mxu0 0
    %1847 = vmatprep.subr.bf16.mxu0 0
    %1848 = vmatpush1.bf16.msra.mxu0 0
    %1849 = vmatprep.subr.bf16.mxu0 0
    %1850 = vmatpush1.bf16.msra.mxu0 0
    %1851 = vmatprep.subr.bf16.mxu0 0
    %1852 = vmatpush1.bf16.msra.mxu0 0
    %1853 = vmatprep.subr.bf16.mxu0 0
    %1854 = vmatpush1.bf16.msra.mxu0 0
    %1855 = vmatprep.subr.bf16.mxu0 0
    %1856 = vmatpush1.bf16.msra.mxu0 0
    %1857 = vmatprep.mubr.bf16.mxu0 0
    %1858 = vmatmul.mubr.bf16.gmra.mrb[0].mxu0 %v848
    %v1859 = vpop.f32.mrb[0].mxu0
    %v1860 = vadd.f32 0.0, %v1859
    %v1861 = vpop.f32.mrb[0].mxu0
    %v1862 = vpop.f32.mrb[0].mxu0
    %v1863 = vadd.f32 0.0, %v1862
    %v1864 = vpop.f32.mrb[0].mxu0
    %1865 = vmatprep.mubr.bf16.mxu0 0
    %1866 = vmatmul.mubr.bf16.gmra.mrb[0].mxu0 %v851
    %v1867 = vpop.f32.mrb[0].mxu0
    %v1868 = vadd.f32 0.0, %v1867
    %v1869 = vpop.f32.mrb[0].mxu0
    %v1870 = vpop.f32.mrb[0].mxu0
    %v1871 = vadd.f32 0.0, %v1870
    %v1872 = vpop.f32.mrb[0].mxu0
    %1873 = vdwg.mxu0
    %v1874 = vadd.f32 %v1811, %v1860
    %v1875 = vadd.f32 %v1814, %v1863
    %v1876 = vadd.f32 %v1819, %v1868
    %v1877 = vadd.f32 %v1822, %v1871
    %s1878 = scalar_lea.vmem %s11, 1
    %v1879 = vld [vmem:[%s1878] sm:$0x1]
    %v1881 = vlaneseq
    %v1882 = vshrl.u32 %v1881, 7
    %v1883 = vsub.s32 0, %v1882
    %v1884 = vrot.slane %v1879, %v1883
    %v1886 = vadd.f32 %v1874, %v1884
    %v1887 = vadd.f32 %v1875, %v1884
    %v1888 = vadd.f32 %v1876, %v1884
    %v1889 = vadd.f32 %v1877, %v1884
    %v1890 = vmax.f32 %v1886, 0.0
    %v1891 = vmax.f32 %v1887, 0.0
    %v1892 = vmax.f32 %v1888, 0.0
    %v1893 = vmax.f32 %v1889, 0.0
    %v1894 = vpack.c.bf16 %v1891, %v1890
    %v1895 = vpack.c.bf16 %v1893, %v1892
    %s1896 = scalar_lea.vmem [#allocation14], 64
    %v1897 = vld [vmem:[%s1896] sm:$0xf]
    %v1898 = vld [vmem:[%s1896 + $0x4] sm:$0xf]
    %v1899 = vld [vmem:[%s1896 + $0x8] sm:$0xf]
    %v1900 = vld [vmem:[%s1896 + $0xc] sm:$0xf]
    %v1901 = vld [vmem:[%s1896 + $0x10] sm:$0xf]
    %v1902 = vld [vmem:[%s1896 + $0x14] sm:$0xf]
    %v1903 = vld [vmem:[%s1896 + $0x18] sm:$0xf]
    %v1904 = vld [vmem:[%s1896 + $0x1c] sm:$0xf]
    %v1905 = vld [vmem:[%s1896 + $0x20] sm:$0xf]
    %v1906 = vld [vmem:[%s1896 + $0x24] sm:$0xf]
    %v1907 = vld [vmem:[%s1896 + $0x28] sm:$0xf]
    %v1908 = vld [vmem:[%s1896 + $0x2c] sm:$0xf]
    %v1909 = vld [vmem:[%s1896 + $0x30] sm:$0xf]
    %v1910 = vld [vmem:[%s1896 + $0x34] sm:$0xf]
    %v1911 = vld [vmem:[%s1896 + $0x38] sm:$0xf]
    %v1912 = vld [vmem:[%s1896 + $0x3c] sm:$0xf]
    %s1913 = scalar_lea.vmem %s13, 1
    %v1914 = vld [vmem:[%s1913] sm:$0x1]
    %v1916 = vlaneseq
    %v1917 = vshrl.u32 %v1916, 7
    %v1918 = vsub.s32 0, %v1917
    %v1919 = vrot.slane %v1914, %v1918
    %v1937 = vunpack.c.l.b16 %v1897
    %v1938 = vunpack.c.l.b16 %v1898
    %v1939 = vunpack.c.l.b16 %v1899
    %v1940 = vunpack.c.l.b16 %v1900
    %v1941 = vunpack.c.l.b16 %v1901
    %v1942 = vunpack.c.l.b16 %v1902
    %v1943 = vunpack.c.l.b16 %v1903
    %v1944 = vunpack.c.l.b16 %v1904
    %v1945 = vunpack.c.l.b16 %v1905
    %v1946 = vunpack.c.l.b16 %v1906
    %v1947 = vunpack.c.l.b16 %v1907
    %v1948 = vunpack.c.l.b16 %v1908
    %v1949 = vunpack.c.l.b16 %v1909
    %v1950 = vunpack.c.l.b16 %v1910
    %v1951 = vunpack.c.l.b16 %v1911
    %v1952 = vunpack.c.l.b16 %v1912
    %v1953 = vpack.c.b16 %v1938, %v1937
    %v1954 = vpack.c.b16 %v1940, %v1939
    %v1955 = vpack.c.b16 %v1942, %v1941
    %v1956 = vpack.c.b16 %v1944, %v1943
    %v1957 = vpack.c.b16 %v1946, %v1945
    %v1958 = vpack.c.b16 %v1948, %v1947
    %v1959 = vpack.c.b16 %v1950, %v1949
    %v1960 = vpack.c.b16 %v1952, %v1951
    %1969 = vmatprep.subr.bf16.mxu0 0
    %1970 = vmatpush1.bf16.msra.mxu0 %v1953
    %1971 = vmatprep.subr.bf16.mxu0 0
    %1972 = vmatpush1.bf16.msra.mxu0 %v1954
    %1973 = vmatprep.subr.bf16.mxu0 0
    %1974 = vmatpush1.bf16.msra.mxu0 %v1955
    %1975 = vmatprep.subr.bf16.mxu0 0
    %1976 = vmatpush1.bf16.msra.mxu0 %v1956
    %1977 = vmatprep.subr.bf16.mxu0 0
    %1978 = vmatpush1.bf16.msra.mxu0 %v1957
    %1979 = vmatprep.subr.bf16.mxu0 0
    %1980 = vmatpush1.bf16.msra.mxu0 %v1958
    %1981 = vmatprep.subr.bf16.mxu0 0
    %1982 = vmatpush1.bf16.msra.mxu0 %v1959
    %1983 = vmatprep.subr.bf16.mxu0 0
    %1984 = vmatpush1.bf16.msra.mxu0 %v1960
    %1985 = vmatprep.subr.bf16.mxu0 0
    %1986 = vmatpush1.bf16.msra.mxu0 0
    %1987 = vmatprep.subr.bf16.mxu0 0
    %1988 = vmatpush1.bf16.msra.mxu0 0
    %1989 = vmatprep.subr.bf16.mxu0 0
    %1990 = vmatpush1.bf16.msra.mxu0 0
    %1991 = vmatprep.subr.bf16.mxu0 0
    %1992 = vmatpush1.bf16.msra.mxu0 0
    %1993 = vmatprep.subr.bf16.mxu0 0
    %1994 = vmatpush1.bf16.msra.mxu0 0
    %1995 = vmatprep.subr.bf16.mxu0 0
    %1996 = vmatpush1.bf16.msra.mxu0 0
    %1997 = vmatprep.subr.bf16.mxu0 0
    %1998 = vmatpush1.bf16.msra.mxu0 0
    %1999 = vmatprep.subr.bf16.mxu0 0
    %2000 = vmatpush1.bf16.msra.mxu0 0
    %2001 = vmatprep.mubr.bf16.mxu0 0
    %2002 = vmatmul.mubr.bf16.gmra.mrb[0].mxu0 %v1894
    %v2003 = vpop.f32.mrb[0].mxu0
    %v2004 = vadd.f32 %v1919, %v2003
    %v2005 = vpop.f32.mrb[0].mxu0
    %v2006 = vpop.f32.mrb[0].mxu0
    %v2007 = vadd.f32 %v1919, %v2006
    %v2008 = vpop.f32.mrb[0].mxu0
    %2009 = vmatprep.mubr.bf16.mxu0 0
    %2010 = vmatmul.mubr.bf16.gmra.mrb[0].mxu0 %v1895
    %v2011 = vpop.f32.mrb[0].mxu0
    %v2012 = vadd.f32 %v1919, %v2011
    %v2013 = vpop.f32.mrb[0].mxu0
    %v2014 = vpop.f32.mrb[0].mxu0
    %v2015 = vadd.f32 %v1919, %v2014
    %v2016 = vpop.f32.mrb[0].mxu0
    %2017 = vdwg.mxu0
    %v2018 = vmax.f32 %v2004, 0.0
    %v2019 = vmax.f32 %v2007, 0.0
    %v2020 = vmax.f32 %v2012, 0.0
    %v2021 = vmax.f32 %v2015, 0.0
    %v2022 = vpack.c.bf16 %v2019, %v2018
    %v2023 = vpack.c.bf16 %v2021, %v2020
    %2024 = vmatprep.subr.bf16.mxu0 0
    %2025 = vmatpush1.bf16.msra.mxu0 %v2022
    %2026 = vmatprep.subr.bf16.mxu0 0
    %2027 = vmatpush1.bf16.msra.mxu0 %v2023
    %2028 = vmatprep.subr.bf16.mxu0 0
    %2029 = vmatpush1.bf16.msra.mxu0 0
    %2030 = vmatprep.subr.bf16.mxu0 0
    %2031 = vmatpush1.bf16.msra.mxu0 0
    %2032 = vmatprep.subr.bf16.mxu0 0
    %2033 = vmatpush1.bf16.msra.mxu0 0
    %2034 = vmatprep.subr.bf16.mxu0 0
    %2035 = vmatpush1.bf16.msra.mxu0 0
    %2036 = vmatprep.subr.bf16.mxu0 0
    %2037 = vmatpush1.bf16.msra.mxu0 0
    %2038 = vmatprep.subr.bf16.mxu0 0
    %2039 = vmatpush1.bf16.msra.mxu0 0
    %2040 = vmatprep.subr.bf16.mxu0 0
    %2041 = vmatpush1.bf16.msra.mxu0 0
    %2042 = vmatprep.subr.bf16.mxu0 0
    %2043 = vmatpush1.bf16.msra.mxu0 0
    %2044 = vmatprep.subr.bf16.mxu0 0
    %2045 = vmatpush1.bf16.msra.mxu0 0
    %2046 = vmatprep.subr.bf16.mxu0 0
    %2047 = vmatpush1.bf16.msra.mxu0 0
    %2048 = vmatprep.subr.bf16.mxu0 0
    %2049 = vmatpush1.bf16.msra.mxu0 0
    %2050 = vmatprep.subr.bf16.mxu0 0
    %2051 = vmatpush1.bf16.msra.mxu0 0
    %2052 = vmatprep.subr.bf16.mxu0 0
    %2053 = vmatpush1.bf16.msra.mxu0 0
    %2054 = vmatprep.subr.bf16.mxu0 0
    %2055 = vmatpush1.bf16.msra.mxu0 0
    %2056 = vmatprep.mubr.bf16.mxu0 0
    %2057 = vmatmul.mubr.bf16.gmra.mrb[0].mxu0 %v1067
    %v2058 = vpop.f32.mrb[0].mxu0
    %v2059 = vadd.f32 0.0, %v2058
    %v2060 = vpop.f32.mrb[0].mxu0
    %v2061 = vpop.f32.mrb[0].mxu0
    %v2062 = vadd.f32 0.0, %v2061
    %v2063 = vpop.f32.mrb[0].mxu0
    %2064 = vdwg.mxu0
    %v2065 = vpack.c.bf16 %v2062, %v2059
    %s2066 = scalar_lea.vmem [#allocation15], 64
    %v2067 = vld [vmem:[%s2066] sm:$0xf]
    %v2068 = vld [vmem:[%s2066 + $0x4] sm:$0xf]
    %v2069 = vld [vmem:[%s2066 + $0x8] sm:$0xf]
    %v2070 = vld [vmem:[%s2066 + $0xc] sm:$0xf]
    %v2071 = vld [vmem:[%s2066 + $0x10] sm:$0xf]
    %v2072 = vld [vmem:[%s2066 + $0x14] sm:$0xf]
    %v2073 = vld [vmem:[%s2066 + $0x18] sm:$0xf]
    %v2074 = vld [vmem:[%s2066 + $0x1c] sm:$0xf]
    %v2075 = vld [vmem:[%s2066 + $0x20] sm:$0xf]
    %v2076 = vld [vmem:[%s2066 + $0x24] sm:$0xf]
    %v2077 = vld [vmem:[%s2066 + $0x28] sm:$0xf]
    %v2078 = vld [vmem:[%s2066 + $0x2c] sm:$0xf]
    %v2079 = vld [vmem:[%s2066 + $0x30] sm:$0xf]
    %v2080 = vld [vmem:[%s2066 + $0x34] sm:$0xf]
    %v2081 = vld [vmem:[%s2066 + $0x38] sm:$0xf]
    %v2082 = vld [vmem:[%s2066 + $0x3c] sm:$0xf]
    %s2083 = scalar_lea.vmem [#allocation17], 64
    %v2084 = vld [vmem:[%s2083] sm:$0xf]
    %v2085 = vld [vmem:[%s2083 + $0x4] sm:$0xf]
    %v2086 = vld [vmem:[%s2083 + $0x8] sm:$0xf]
    %v2087 = vld [vmem:[%s2083 + $0xc] sm:$0xf]
    %v2088 = vld [vmem:[%s2083 + $0x10] sm:$0xf]
    %v2089 = vld [vmem:[%s2083 + $0x14] sm:$0xf]
    %v2090 = vld [vmem:[%s2083 + $0x18] sm:$0xf]
    %v2091 = vld [vmem:[%s2083 + $0x1c] sm:$0xf]
    %v2092 = vld [vmem:[%s2083 + $0x20] sm:$0xf]
    %v2093 = vld [vmem:[%s2083 + $0x24] sm:$0xf]
    %v2094 = vld [vmem:[%s2083 + $0x28] sm:$0xf]
    %v2095 = vld [vmem:[%s2083 + $0x2c] sm:$0xf]
    %v2096 = vld [vmem:[%s2083 + $0x30] sm:$0xf]
    %v2097 = vld [vmem:[%s2083 + $0x34] sm:$0xf]
    %v2098 = vld [vmem:[%s2083 + $0x38] sm:$0xf]
    %v2099 = vld [vmem:[%s2083 + $0x3c] sm:$0xf]
    %v2116 = vunpack.c.l.b16 %v2084
    %v2117 = vunpack.c.l.b16 %v2085
    %v2118 = vunpack.c.l.b16 %v2086
    %v2119 = vunpack.c.l.b16 %v2087
    %v2120 = vunpack.c.l.b16 %v2088
    %v2121 = vunpack.c.l.b16 %v2089
    %v2122 = vunpack.c.l.b16 %v2090
    %v2123 = vunpack.c.l.b16 %v2091
    %v2124 = vunpack.c.l.b16 %v2092
    %v2125 = vunpack.c.l.b16 %v2093
    %v2126 = vunpack.c.l.b16 %v2094
    %v2127 = vunpack.c.l.b16 %v2095
    %v2128 = vunpack.c.l.b16 %v2096
    %v2129 = vunpack.c.l.b16 %v2097
    %v2130 = vunpack.c.l.b16 %v2098
    %v2131 = vunpack.c.l.b16 %v2099
    %v2132 = vpack.c.b16 %v2117, %v2116
    %v2133 = vpack.c.b16 %v2119, %v2118
    %v2134 = vpack.c.b16 %v2121, %v2120
    %v2135 = vpack.c.b16 %v2123, %v2122
    %v2136 = vpack.c.b16 %v2125, %v2124
    %v2137 = vpack.c.b16 %v2127, %v2126
    %v2138 = vpack.c.b16 %v2129, %v2128
    %v2139 = vpack.c.b16 %v2131, %v2130
    %2148 = vmatprep.subr.bf16.mxu0 0
    %2149 = vmatpush1.bf16.msra.mxu0 %v2132
    %2150 = vmatprep.subr.bf16.mxu0 0
    %2151 = vmatpush1.bf16.msra.mxu0 %v2133
    %2152 = vmatprep.subr.bf16.mxu0 0
    %2153 = vmatpush1.bf16.msra.mxu0 %v2134
    %2154 = vmatprep.subr.bf16.mxu0 0
    %2155 = vmatpush1.bf16.msra.mxu0 %v2135
    %2156 = vmatprep.subr.bf16.mxu0 0
    %2157 = vmatpush1.bf16.msra.mxu0 %v2136
    %2158 = vmatprep.subr.bf16.mxu0 0
    %2159 = vmatpush1.bf16.msra.mxu0 %v2137
    %2160 = vmatprep.subr.bf16.mxu0 0
    %2161 = vmatpush1.bf16.msra.mxu0 %v2138
    %2162 = vmatprep.subr.bf16.mxu0 0
    %2163 = vmatpush1.bf16.msra.mxu0 %v2139
    %2164 = vmatprep.subr.bf16.mxu0 0
    %2165 = vmatpush1.bf16.msra.mxu0 0
    %2166 = vmatprep.subr.bf16.mxu0 0
    %2167 = vmatpush1.bf16.msra.mxu0 0
    %2168 = vmatprep.subr.bf16.mxu0 0
    %2169 = vmatpush1.bf16.msra.mxu0 0
    %2170 = vmatprep.subr.bf16.mxu0 0
    %2171 = vmatpush1.bf16.msra.mxu0 0
    %2172 = vmatprep.subr.bf16.mxu0 0
    %2173 = vmatpush1.bf16.msra.mxu0 0
    %2174 = vmatprep.subr.bf16.mxu0 0
    %2175 = vmatpush1.bf16.msra.mxu0 0
    %2176 = vmatprep.subr.bf16.mxu0 0
    %2177 = vmatpush1.bf16.msra.mxu0 0
    %2178 = vmatprep.subr.bf16.mxu0 0
    %2179 = vmatpush1.bf16.msra.mxu0 0
    %2180 = vmatprep.mubr.bf16.mxu0 0
    %2181 = vmatmul.mubr.bf16.gmra.mrb[0].mxu0 %v2065
    %v2182 = vpop.f32.mrb[0].mxu0
    %v2183 = vadd.f32 0.0, %v2182
    %v2184 = vpop.f32.mrb[0].mxu0
    %v2185 = vpop.f32.mrb[0].mxu0
    %v2186 = vadd.f32 0.0, %v2185
    %v2187 = vpop.f32.mrb[0].mxu0
    %2188 = vdwg.mxu0
    %v2205 = vunpack.c.l.b16 %v2067
    %v2206 = vunpack.c.l.b16 %v2068
    %v2207 = vunpack.c.l.b16 %v2069
    %v2208 = vunpack.c.l.b16 %v2070
    %v2209 = vunpack.c.l.b16 %v2071
    %v2210 = vunpack.c.l.b16 %v2072
    %v2211 = vunpack.c.l.b16 %v2073
    %v2212 = vunpack.c.l.b16 %v2074
    %v2213 = vunpack.c.l.b16 %v2075
    %v2214 = vunpack.c.l.b16 %v2076
    %v2215 = vunpack.c.l.b16 %v2077
    %v2216 = vunpack.c.l.b16 %v2078
    %v2217 = vunpack.c.l.b16 %v2079
    %v2218 = vunpack.c.l.b16 %v2080
    %v2219 = vunpack.c.l.b16 %v2081
    %v2220 = vunpack.c.l.b16 %v2082
    %v2221 = vpack.c.b16 %v2206, %v2205
    %v2222 = vpack.c.b16 %v2208, %v2207
    %v2223 = vpack.c.b16 %v2210, %v2209
    %v2224 = vpack.c.b16 %v2212, %v2211
    %v2225 = vpack.c.b16 %v2214, %v2213
    %v2226 = vpack.c.b16 %v2216, %v2215
    %v2227 = vpack.c.b16 %v2218, %v2217
    %v2228 = vpack.c.b16 %v2220, %v2219
    %2237 = vmatprep.subr.bf16.mxu0 0
    %2238 = vmatpush1.bf16.msra.mxu0 %v2221
    %2239 = vmatprep.subr.bf16.mxu0 0
    %2240 = vmatpush1.bf16.msra.mxu0 %v2222
    %2241 = vmatprep.subr.bf16.mxu0 0
    %2242 = vmatpush1.bf16.msra.mxu0 %v2223
    %2243 = vmatprep.subr.bf16.mxu0 0
    %2244 = vmatpush1.bf16.msra.mxu0 %v2224
    %2245 = vmatprep.subr.bf16.mxu0 0
    %2246 = vmatpush1.bf16.msra.mxu0 %v2225
    %2247 = vmatprep.subr.bf16.mxu0 0
    %2248 = vmatpush1.bf16.msra.mxu0 %v2226
    %2249 = vmatprep.subr.bf16.mxu0 0
    %2250 = vmatpush1.bf16.msra.mxu0 %v2227
    %2251 = vmatprep.subr.bf16.mxu0 0
    %2252 = vmatpush1.bf16.msra.mxu0 %v2228
    %2253 = vmatprep.subr.bf16.mxu0 0
    %2254 = vmatpush1.bf16.msra.mxu0 0
    %2255 = vmatprep.subr.bf16.mxu0 0
    %2256 = vmatpush1.bf16.msra.mxu0 0
    %2257 = vmatprep.subr.bf16.mxu0 0
    %2258 = vmatpush1.bf16.msra.mxu0 0
    %2259 = vmatprep.subr.bf16.mxu0 0
    %2260 = vmatpush1.bf16.msra.mxu0 0
    %2261 = vmatprep.subr.bf16.mxu0 0
    %2262 = vmatpush1.bf16.msra.mxu0 0
    %2263 = vmatprep.subr.bf16.mxu0 0
    %2264 = vmatpush1.bf16.msra.mxu0 0
    %2265 = vmatprep.subr.bf16.mxu0 0
    %2266 = vmatpush1.bf16.msra.mxu0 0
    %2267 = vmatprep.subr.bf16.mxu0 0
    %2268 = vmatpush1.bf16.msra.mxu0 0
    %2269 = vmatprep.mubr.bf16.mxu0 0
    %2270 = vmatmul.mubr.bf16.gmra.mrb[0].mxu0 %v1447
    %v2271 = vpop.f32.mrb[0].mxu0
    %v2272 = vadd.f32 %v2183, %v2271
    %v2273 = vpop.f32.mrb[0].mxu0
    %v2274 = vpop.f32.mrb[0].mxu0
    %v2275 = vadd.f32 %v2186, %v2274
    %v2276 = vpop.f32.mrb[0].mxu0
    %2277 = vdwg.mxu0
    %s2278 = scalar_lea.vmem %s16, 1
    %v2279 = vld [vmem:[%s2278] sm:$0x1]
    %v2281 = vlaneseq
    %v2282 = vshrl.u32 %v2281, 7
    %v2283 = vsub.s32 0, %v2282
    %v2284 = vrot.slane %v2279, %v2283
    %v2286 = vadd.f32 %v2272, %v2284
    %v2287 = vadd.f32 %v2275, %v2284
    %v2288 = vmax.f32 %v2286, 0.0
    %v2289 = vmax.f32 %v2287, 0.0
    %v2290 = vpack.c.bf16 %v2289, %v2288
    %s2291 = scalar_lea.vmem [#allocation18], 64
    %v2292 = vld [vmem:[%s2291] sm:$0xf]
    %v2293 = vld [vmem:[%s2291 + $0x4] sm:$0xf]
    %v2294 = vld [vmem:[%s2291 + $0x8] sm:$0xf]
    %v2295 = vld [vmem:[%s2291 + $0xc] sm:$0xf]
    %v2296 = vld [vmem:[%s2291 + $0x10] sm:$0xf]
    %v2297 = vld [vmem:[%s2291 + $0x14] sm:$0xf]
    %v2298 = vld [vmem:[%s2291 + $0x18] sm:$0xf]
    %v2299 = vld [vmem:[%s2291 + $0x1c] sm:$0xf]
    %v2300 = vld [vmem:[%s2291 + $0x20] sm:$0xf]
    %v2301 = vld [vmem:[%s2291 + $0x24] sm:$0xf]
    %v2302 = vld [vmem:[%s2291 + $0x28] sm:$0xf]
    %v2303 = vld [vmem:[%s2291 + $0x2c] sm:$0xf]
    %v2304 = vld [vmem:[%s2291 + $0x30] sm:$0xf]
    %v2305 = vld [vmem:[%s2291 + $0x34] sm:$0xf]
    %v2306 = vld [vmem:[%s2291 + $0x38] sm:$0xf]
    %v2307 = vld [vmem:[%s2291 + $0x3c] sm:$0xf]
    %s2308 = scalar_lea.vmem %s18, 1
    %v2309 = vld [vmem:[%s2308] sm:$0x1]
    %v2311 = vlaneseq
    %v2312 = vshrl.u32 %v2311, 7
    %v2313 = vsub.s32 0, %v2312
    %v2314 = vrot.slane %v2309, %v2313
    %v2332 = vunpack.c.l.b16 %v2292
    %v2333 = vunpack.c.l.b16 %v2293
    %v2334 = vunpack.c.l.b16 %v2294
    %v2335 = vunpack.c.l.b16 %v2295
    %v2336 = vunpack.c.l.b16 %v2296
    %v2337 = vunpack.c.l.b16 %v2297
    %v2338 = vunpack.c.l.b16 %v2298
    %v2339 = vunpack.c.l.b16 %v2299
    %v2340 = vunpack.c.l.b16 %v2300
    %v2341 = vunpack.c.l.b16 %v2301
    %v2342 = vunpack.c.l.b16 %v2302
    %v2343 = vunpack.c.l.b16 %v2303
    %v2344 = vunpack.c.l.b16 %v2304
    %v2345 = vunpack.c.l.b16 %v2305
    %v2346 = vunpack.c.l.b16 %v2306
    %v2347 = vunpack.c.l.b16 %v2307
    %v2348 = vpack.c.b16 %v2333, %v2332
    %v2349 = vpack.c.b16 %v2335, %v2334
    %v2350 = vpack.c.b16 %v2337, %v2336
    %v2351 = vpack.c.b16 %v2339, %v2338
    %v2352 = vpack.c.b16 %v2341, %v2340
    %v2353 = vpack.c.b16 %v2343, %v2342
    %v2354 = vpack.c.b16 %v2345, %v2344
    %v2355 = vpack.c.b16 %v2347, %v2346
    %2364 = vmatprep.subr.bf16.mxu0 0
    %2365 = vmatpush1.bf16.msra.mxu0 %v2348
    %2366 = vmatprep.subr.bf16.mxu0 0
    %2367 = vmatpush1.bf16.msra.mxu0 %v2349
    %2368 = vmatprep.subr.bf16.mxu0 0
    %2369 = vmatpush1.bf16.msra.mxu0 %v2350
    %2370 = vmatprep.subr.bf16.mxu0 0
    %2371 = vmatpush1.bf16.msra.mxu0 %v2351
    %2372 = vmatprep.subr.bf16.mxu0 0
    %2373 = vmatpush1.bf16.msra.mxu0 %v2352
    %2374 = vmatprep.subr.bf16.mxu0 0
    %2375 = vmatpush1.bf16.msra.mxu0 %v2353
    %2376 = vmatprep.subr.bf16.mxu0 0
    %2377 = vmatpush1.bf16.msra.mxu0 %v2354
    %2378 = vmatprep.subr.bf16.mxu0 0
    %2379 = vmatpush1.bf16.msra.mxu0 %v2355
    %2380 = vmatprep.subr.bf16.mxu0 0
    %2381 = vmatpush1.bf16.msra.mxu0 0
    %2382 = vmatprep.subr.bf16.mxu0 0
    %2383 = vmatpush1.bf16.msra.mxu0 0
    %2384 = vmatprep.subr.bf16.mxu0 0
    %2385 = vmatpush1.bf16.msra.mxu0 0
    %2386 = vmatprep.subr.bf16.mxu0 0
    %2387 = vmatpush1.bf16.msra.mxu0 0
    %2388 = vmatprep.subr.bf16.mxu0 0
    %2389 = vmatpush1.bf16.msra.mxu0 0
    %2390 = vmatprep.subr.bf16.mxu0 0
    %2391 = vmatpush1.bf16.msra.mxu0 0
    %2392 = vmatprep.subr.bf16.mxu0 0
    %2393 = vmatpush1.bf16.msra.mxu0 0
    %2394 = vmatprep.subr.bf16.mxu0 0
    %2395 = vmatpush1.bf16.msra.mxu0 0
    %2396 = vmatprep.mubr.bf16.mxu0 0
    %2397 = vmatmul.mubr.bf16.gmra.mrb[0].mxu0 %v2290
    %v2398 = vpop.f32.mrb[0].mxu0
    %v2399 = vadd.f32 %v2314, %v2398
    %v2400 = vpop.f32.mrb[0].mxu0
    %v2401 = vpop.f32.mrb[0].mxu0
    %v2402 = vadd.f32 %v2314, %v2401
    %v2403 = vpop.f32.mrb[0].mxu0
    %2404 = vdwg.mxu0
    %v2405 = vmax.f32 %v2399, 0.0
    %v2406 = vmax.f32 %v2402, 0.0
    %v2407 = vpack.c.bf16 %v2406, %v2405
    %v2408 = vunpack.c.l.bf16 %v2407
    %v2409 = vunpack.c.h.bf16 %v2407
    %v2410 = vadd.f32 %v2408, %v2409
    %v2411 = vrot.slane %v2410, 4
    %v2412 = vadd.f32 %v2410, %v2411
    %v2413 = vrot.slane %v2412, 2
    %v2414 = vadd.f32 %v2412, %v2413
    %v2415 = vrot.slane %v2414, 1
    %v2416 = vadd.f32 %v2414, %v2415
    %v2417 = vpack.c.bf16 %v2416, %v2416
    %v2418 = vunpack.c.l.bf16 %v2022
    %v2419 = vunpack.c.h.bf16 %v2022
    %v2420 = vunpack.c.l.bf16 %v2023
    %v2421 = vunpack.c.h.bf16 %v2023
    %v2422 = vadd.f32 %v2418, %v2419
    %v2423 = vadd.f32 %v2422, %v2420
    %v2424 = vadd.f32 %v2423, %v2421
    %v2425 = vrot.slane %v2424, 4
    %v2426 = vadd.f32 %v2424, %v2425
    %v2427 = vrot.slane %v2426, 2
    %v2428 = vadd.f32 %v2426, %v2427
    %v2429 = vrot.slane %v2428, 1
    %v2430 = vadd.f32 %v2428, %v2429
    %v2431 = vpack.c.bf16 %v2430, %v2430
    %v2432 = vld [vmem:[#allocation20] sm:$0xf]
    %v2433 = vld [vmem:[#allocation20 + $0x4] sm:$0xf]
    %v2434 = vld [vmem:[#allocation20 + $0x8] sm:$0xf]
    %v2435 = vld [vmem:[#allocation20 + $0xc] sm:$0xf]
    %v2436 = vld [vmem:[#allocation20 + $0x10] sm:$0xf]
    %v2437 = vld [vmem:[#allocation20 + $0x14] sm:$0xf]
    %v2438 = vld [vmem:[#allocation20 + $0x18] sm:$0xf]
    %v2439 = vld [vmem:[#allocation20 + $0x1c] sm:$0xf]
    %v2440 = vld [vmem:[#allocation20 + $0x20] sm:$0xf]
    %v2441 = vld [vmem:[#allocation20 + $0x24] sm:$0xf]
    %v2442 = vld [vmem:[#allocation20 + $0x28] sm:$0xf]
    %v2443 = vld [vmem:[#allocation20 + $0x2c] sm:$0xf]
    %v2444 = vld [vmem:[#allocation20 + $0x30] sm:$0xf]
    %v2445 = vld [vmem:[#allocation20 + $0x34] sm:$0xf]
    %v2446 = vld [vmem:[#allocation20 + $0x38] sm:$0xf]
    %v2447 = vld [vmem:[#allocation20 + $0x3c] sm:$0xf]
    %v2448 = vld [vmem:[%s20] sm:$0x1]
    %v2449 = vmul.f32 %v2448, 16.0
    %v2466 = vunpack.c.l.b16 %v2432
    %v2467 = vunpack.c.l.b16 %v2433
    %v2468 = vunpack.c.l.b16 %v2434
    %v2469 = vunpack.c.l.b16 %v2435
    %v2470 = vunpack.c.l.b16 %v2436
    %v2471 = vunpack.c.l.b16 %v2437
    %v2472 = vunpack.c.l.b16 %v2438
    %v2473 = vunpack.c.l.b16 %v2439
    %v2474 = vunpack.c.l.b16 %v2440
    %v2475 = vunpack.c.l.b16 %v2441
    %v2476 = vunpack.c.l.b16 %v2442
    %v2477 = vunpack.c.l.b16 %v2443
    %v2478 = vunpack.c.l.b16 %v2444
    %v2479 = vunpack.c.l.b16 %v2445
    %v2480 = vunpack.c.l.b16 %v2446
    %v2481 = vunpack.c.l.b16 %v2447
    %v2482 = vpack.c.b16 %v2467, %v2466
    %v2483 = vpack.c.b16 %v2469, %v2468
    %v2484 = vpack.c.b16 %v2471, %v2470
    %v2485 = vpack.c.b16 %v2473, %v2472
    %v2486 = vpack.c.b16 %v2475, %v2474
    %v2487 = vpack.c.b16 %v2477, %v2476
    %v2488 = vpack.c.b16 %v2479, %v2478
    %v2489 = vpack.c.b16 %v2481, %v2480
    %2498 = vmatprep.subr.bf16.mxu0 0
    %2499 = vmatpush1.bf16.msra.mxu0 %v2482
    %2500 = vmatprep.subr.bf16.mxu0 0
    %2501 = vmatpush1.bf16.msra.mxu0 %v2483
    %2502 = vmatprep.subr.bf16.mxu0 0
    %2503 = vmatpush1.bf16.msra.mxu0 %v2484
    %2504 = vmatprep.subr.bf16.mxu0 0
    %2505 = vmatpush1.bf16.msra.mxu0 %v2485
    %2506 = vmatprep.subr.bf16.mxu0 0
    %2507 = vmatpush1.bf16.msra.mxu0 %v2486
    %2508 = vmatprep.subr.bf16.mxu0 0
    %2509 = vmatpush1.bf16.msra.mxu0 %v2487
    %2510 = vmatprep.subr.bf16.mxu0 0
    %2511 = vmatpush1.bf16.msra.mxu0 %v2488
    %2512 = vmatprep.subr.bf16.mxu0 0
    %2513 = vmatpush1.bf16.msra.mxu0 %v2489
    %2514 = vmatprep.subr.bf16.mxu0 0
    %2515 = vmatpush1.bf16.msra.mxu0 0
    %2516 = vmatprep.subr.bf16.mxu0 0
    %2517 = vmatpush1.bf16.msra.mxu0 0
    %2518 = vmatprep.subr.bf16.mxu0 0
    %2519 = vmatpush1.bf16.msra.mxu0 0
    %2520 = vmatprep.subr.bf16.mxu0 0
    %2521 = vmatpush1.bf16.msra.mxu0 0
    %2522 = vmatprep.subr.bf16.mxu0 0
    %2523 = vmatpush1.bf16.msra.mxu0 0
    %2524 = vmatprep.subr.bf16.mxu0 0
    %2525 = vmatpush1.bf16.msra.mxu0 0
    %2526 = vmatprep.subr.bf16.mxu0 0
    %2527 = vmatpush1.bf16.msra.mxu0 0
    %2528 = vmatprep.subr.bf16.mxu0 0
    %2529 = vmatpush1.bf16.msra.mxu0 0
    %2530 = vmatprep.mubr.bf16.mxu0 0
    %2531 = vmatmul.mubr.bf16.gmra.mrb[0].mxu0 %v2417
    %v2532 = vpop.f32.mrb[0].mxu0
    %v2533 = vadd.f32 %v2449, %v2532
    %v2534 = vpop.f32.mrb[0].mxu0
    %v2535 = vpop.f32.mrb[0].mxu0
    %v2536 = vpop.f32.mrb[0].mxu0
    %2537 = vdwg.mxu0
    %v2538 = vld [vmem:[#allocation21] sm:$0xf]
    %v2539 = vld [vmem:[#allocation21 + $0x4] sm:$0xf]
    %v2540 = vld [vmem:[#allocation21 + $0x8] sm:$0xf]
    %v2541 = vld [vmem:[#allocation21 + $0xc] sm:$0xf]
    %v2542 = vld [vmem:[#allocation21 + $0x10] sm:$0xf]
    %v2543 = vld [vmem:[#allocation21 + $0x14] sm:$0xf]
    %v2544 = vld [vmem:[#allocation21 + $0x18] sm:$0xf]
    %v2545 = vld [vmem:[#allocation21 + $0x1c] sm:$0xf]
    %v2546 = vld [vmem:[#allocation21 + $0x20] sm:$0xf]
    %v2547 = vld [vmem:[#allocation21 + $0x24] sm:$0xf]
    %v2548 = vld [vmem:[#allocation21 + $0x28] sm:$0xf]
    %v2549 = vld [vmem:[#allocation21 + $0x2c] sm:$0xf]
    %v2550 = vld [vmem:[#allocation21 + $0x30] sm:$0xf]
    %v2551 = vld [vmem:[#allocation21 + $0x34] sm:$0xf]
    %v2552 = vld [vmem:[#allocation21 + $0x38] sm:$0xf]
    %v2553 = vld [vmem:[#allocation21 + $0x3c] sm:$0xf]
    %v2554 = vld [vmem:[%s22] sm:$0x1]
    %v2555 = vmul.f32 %v2554, 32.0
    %v2572 = vunpack.c.l.b16 %v2538
    %v2573 = vunpack.c.l.b16 %v2539
    %v2574 = vunpack.c.l.b16 %v2540
    %v2575 = vunpack.c.l.b16 %v2541
    %v2576 = vunpack.c.l.b16 %v2542
    %v2577 = vunpack.c.l.b16 %v2543
    %v2578 = vunpack.c.l.b16 %v2544
    %v2579 = vunpack.c.l.b16 %v2545
    %v2580 = vunpack.c.l.b16 %v2546
    %v2581 = vunpack.c.l.b16 %v2547
    %v2582 = vunpack.c.l.b16 %v2548
    %v2583 = vunpack.c.l.b16 %v2549
    %v2584 = vunpack.c.l.b16 %v2550
    %v2585 = vunpack.c.l.b16 %v2551
    %v2586 = vunpack.c.l.b16 %v2552
    %v2587 = vunpack.c.l.b16 %v2553
    %v2588 = vpack.c.b16 %v2573, %v2572
    %v2589 = vpack.c.b16 %v2575, %v2574
    %v2590 = vpack.c.b16 %v2577, %v2576
    %v2591 = vpack.c.b16 %v2579, %v2578
    %v2592 = vpack.c.b16 %v2581, %v2580
    %v2593 = vpack.c.b16 %v2583, %v2582
    %v2594 = vpack.c.b16 %v2585, %v2584
    %v2595 = vpack.c.b16 %v2587, %v2586
    %2604 = vmatprep.subr.bf16.mxu0 0
    %2605 = vmatpush1.bf16.msra.mxu0 %v2588
    %2606 = vmatprep.subr.bf16.mxu0 0
    %2607 = vmatpush1.bf16.msra.mxu0 %v2589
    %2608 = vmatprep.subr.bf16.mxu0 0
    %2609 = vmatpush1.bf16.msra.mxu0 %v2590
    %2610 = vmatprep.subr.bf16.mxu0 0
    %2611 = vmatpush1.bf16.msra.mxu0 %v2591
    %2612 = vmatprep.subr.bf16.mxu0 0
    %2613 = vmatpush1.bf16.msra.mxu0 %v2592
    %2614 = vmatprep.subr.bf16.mxu0 0
    %2615 = vmatpush1.bf16.msra.mxu0 %v2593
    %2616 = vmatprep.subr.bf16.mxu0 0
    %2617 = vmatpush1.bf16.msra.mxu0 %v2594
    %2618 = vmatprep.subr.bf16.mxu0 0
    %2619 = vmatpush1.bf16.msra.mxu0 %v2595
    %2620 = vmatprep.subr.bf16.mxu0 0
    %2621 = vmatpush1.bf16.msra.mxu0 0
    %2622 = vmatprep.subr.bf16.mxu0 0
    %2623 = vmatpush1.bf16.msra.mxu0 0
    %2624 = vmatprep.subr.bf16.mxu0 0
    %2625 = vmatpush1.bf16.msra.mxu0 0
    %2626 = vmatprep.subr.bf16.mxu0 0
    %2627 = vmatpush1.bf16.msra.mxu0 0
    %2628 = vmatprep.subr.bf16.mxu0 0
    %2629 = vmatpush1.bf16.msra.mxu0 0
    %2630 = vmatprep.subr.bf16.mxu0 0
    %2631 = vmatpush1.bf16.msra.mxu0 0
    %2632 = vmatprep.subr.bf16.mxu0 0
    %2633 = vmatpush1.bf16.msra.mxu0 0
    %2634 = vmatprep.subr.bf16.mxu0 0
    %2635 = vmatpush1.bf16.msra.mxu0 0
    %2636 = vmatprep.mubr.bf16.mxu0 0
    %2637 = vmatmul.mubr.bf16.gmra.mrb[0].mxu0 %v2431
    %v2638 = vpop.f32.mrb[0].mxu0
    %v2639 = vadd.f32 %v2555, %v2638
    %v2640 = vpop.f32.mrb[0].mxu0
    %v2641 = vpop.f32.mrb[0].mxu0
    %v2642 = vpop.f32.mrb[0].mxu0
    %2643 = vdwg.mxu0
    %v2644 = vld [vmem:[%s23] sm:$0x3]
    %v2645 = vmul.f32 %v2639, %v2644
    %vm2646 = vcmask 1040384
    %v2647 = vsel %vm2646, %v2645, 0.0
    %2648 = vadd.xlane.f32.xlu0 %v2647
    %v2649 = vpop.xlane.xlu0 %2648
    %v2651 = vlaneseq
    %v2652 = vshrl.u32 %v2651, 7
    %v2653 = vsub.s32 1, %v2652
    %v2654 = vrot.slane %v2644, %v2653
    %v2656 = vmul.f32 %v2533, %v2654
    %v2657 = vsel %vm2646, %v2656, 0.0
    %2658 = vadd.xlane.f32.xlu0 %v2657
    %v2659 = vpop.xlane.xlu0 %2658
    %v2660 = vadd.f32 %v2649, %v2659
    %v2661 = vld [vmem:[#allocation2] sm:$0x1]
    %v2662 = vadd.f32 %v2660, %v2661
    %v2663 = vxor.u32 %v2662, 2147483648
    %v2664 = vmul.f32 %v2663, 1.442695
    %v2665 = vpow.pop %v2664
    %v2666 = vadd.f32 %v2665, 1.0
    %v2667 = vrcp.pop %v2666
    %v2668 = vmul.f32 1.0, %v2667
    %2670 = vset.pattern.permute.xlu0 0
    %2671 = vperm.xlu0 %2670, %v2668
    %v2672 = vpop.permute.xlu0 %2671
    %2674 = vst [vmem:[#allocation23] sm:$0x1] %v2672
    // Predicated region
    $region150: #{tpu_custom_call.1} parent=1 // pred_check
      _
    $region151: #{tpu_custom_call.1} parent=1 // pred_check_branch
      %2676 = sbr.rel (0) target = $region153
    $region152: #{tpu_custom_call.1} parent=1 // pred_region
      %s2678 = ssub.s32 16, 16
      %2679 = vsyncadd [#allocation5], %s2678
      %s2681 = sshll.u32 [#allocation23], 4
      %s2682 = int_to_ptr.vmem [resolvable:$true] %s2681
      %2684 = dma.vmem_to_hbm [thread:$0]  %s2682, 16, %s25, [#allocation5]
    $region153: #{tpu_custom_call.1} parent=1 // pred_fallthru
      _
    // Predicated region
    $region154: #{tpu_custom_call.1} parent=1 // pred_check
      _
    $region155: #{tpu_custom_call.1} parent=1 // pred_check_branch
      %2686 = sbr.rel (0) target = $region157
    $region156: #{tpu_custom_call.1} parent=1 // pred_region
      %2687 = dma.done [#allocation5], 16
    $region157: #{tpu_custom_call.1} parent=1 // pred_fallthru
      _
    %2688 = vsyncpa [#allocation4], 1
    %2689 = vsyncpa [#allocation7], 1
    %2690 = vsyncpa [#allocation10], 1
    %2691 = vsyncpa [#allocation13], 1
    %2692 = vsyncpa [#allocation16], 1
    %2693 = vsyncpa [#allocation19], 1
    %2694 = vsyncpa [#allocation22], 1
    %2695 = vsyncpa [#allocation5], 1

</llo_original>
